<compile_context>
chip_gen: v7x
topology: tpu7x:2x2x1
jax: 0.10.0
libtpu: 0.0.40
codegen_flags: <defaults>
</compile_context>

<pallas_src>
import jax
import jax.numpy as jnp
from jax.experimental import pallas as pl
from jax.experimental.pallas import tpu as pltpu


def _full_spec(shape):
    nd = len(shape)
    return pl.BlockSpec(shape, lambda i, _nd=nd: (0,) * _nd)


def _make_kernel(num_layers, batch, hidden, timesteps):
    H = hidden
    H2, H3 = 2 * H, 3 * H

    def kernel(prev_ref, next_ref, wc_ref, bc_ref, row0_ref, bias0_ref,
               whh0_ref, wf_ref, bf_ref, w1_ref, b1_ref, voices_ref):
        # prev/next : (num_layers, batch, D_state) f32
        # wc  : (D_state, H) bf16     bc   : (1, H)  f32      compact Linear
        # row0: (1, 4H) f32           bias0: (1, 4H) f32      scale[0] folded into layer 0
        # whh0: (H, 4H) bf16                                   layer-0 hidden-side weight
        # wf  : (max(L-1,1), 2H, 4H) bf16   bf: (max(L-1,1), 1, 4H) f32   layers 1..L-1 fused
        # w1  : (1, H) f32            b1   : (1, 1) f32        scale[1]
        # voices_ref: (batch, timesteps) f32
        f32 = jnp.float32
        bf16 = jnp.bfloat16

        # ---- initial GRU states: tanh(compact(next)) - tanh(compact(prev)), per layer ----
        wc = wc_ref[...]
        bc = bc_ref[...]
        states = []
        for l in range(num_layers):
            cp = jnp.tanh(jnp.dot(prev_ref[l].astype(bf16), wc,
                                  preferred_element_type=f32) + bc)
            cn = jnp.tanh(jnp.dot(next_ref[l].astype(bf16), wc,
                                  preferred_element_type=f32) + bc)
            states.append(cn - cp)                               # (batch, H) f32

        row0 = row0_ref[...]
        bias0 = bias0_ref[...]
        whh0 = whh0_ref[...]
        w1 = w1_ref[...]
        b1 = b1_ref[...]

        voice = jnp.zeros((batch, 1), f32)                       # torch.zeros((1, batch, 1))
        cols = []
        for _ in range(timesteps):
            # ---- layer 0, with scale[0] folded in: single h0 @ Whh0 matmul ----
            h0 = states[0]
            g = (voice * row0 + bias0
                 + jnp.dot(h0.astype(bf16), whh0, preferred_element_type=f32))
            rz = jax.nn.sigmoid(g[:, :H2])
            r = rz[:, :H]
            z = rz[:, H:H2]
            n = jnp.tanh(g[:, H2:H3] + r * g[:, H3:])
            h_new = (1.0 - z) * n + z * h0
            states[0] = h_new
            x = h_new
            # ---- layers 1..L-1: fused [x, h] @ (2H, 4H) matmul ----
            for l in range(1, num_layers):
                h_prev = states[l]
                xh = jnp.concatenate([x, h_prev], axis=1).astype(bf16)  # (batch, 2H)
                g = jnp.dot(xh, wf_ref[l - 1],
                            preferred_element_type=f32) + bf_ref[l - 1]
                rz = jax.nn.sigmoid(g[:, :H2])
                r = rz[:, :H]
                z = rz[:, H:H2]
                n = jnp.tanh(g[:, H2:H3] + r * g[:, H3:])
                h_new = (1.0 - z) * n + z * h_prev
                states[l] = h_new
                x = h_new
            # ---- scale[1]: Linear(H -> 1) as mul + lane-reduce (keeps (batch, 1)) ----
            voice = jnp.sum(x * w1, axis=-1, keepdims=True) + b1
            cols.append(voice)

        # single store of the whole result
        voices_ref[...] = jnp.concatenate(cols, axis=1).astype(voices_ref.dtype)

    return kernel


def _fuse_params(params, num_layers, hidden):
    """Wrapper-side weight fusion (gate order r|z|n, pre-transposed weights)."""
    H = hidden
    f32 = jnp.float32
    wih, whh = params['wih'], params['whh']      # (L, H, 3H)
    bih, bhh = params['bih'], params['bhh']      # (L, 1, 3H)
    w0, b0 = params['w0'], params['b0']          # (1, H)
    zeros_hh = jnp.zeros((H, H), f32)
    zeros_1h = jnp.zeros((1, H), f32)

    # --- layer 0: fold scale[0] (x = voice*w0 + b0) into the input-side gates ---
    wih0_rz, wih0_n = wih[0, :, :2 * H], wih[0, :, 2 * H:]
    whh0_rz, whh0_n = whh[0, :, :2 * H], whh[0, :, 2 * H:]
    row0 = jnp.concatenate([w0 @ wih0_rz, w0 @ wih0_n, zeros_1h], axis=1)      # (1, 4H)
    bias0 = jnp.concatenate(
        [b0 @ wih0_rz + bih[0, :, :2 * H] + bhh[0, :, :2 * H],
         b0 @ wih0_n + bih[0, :, 2 * H:],
         bhh[0, :, 2 * H:]], axis=1)                                            # (1, 4H)
    whh0 = jnp.concatenate([whh0_rz, zeros_hh, whh0_n], axis=1)                 # (H, 4H)

    # --- layers 1..L-1: fused [x, h] weight (2H, 4H) = [Wih_rz+Whh_rz | Wih_n | Whh_n] ---
    wf_list, bf_list = [], []
    for l in range(1, num_layers):
        top = jnp.concatenate([wih[l, :, :2 * H], wih[l, :, 2 * H:], zeros_hh], axis=1)
        bot = jnp.concatenate([whh[l, :, :2 * H], zeros_hh, whh[l, :, 2 * H:]], axis=1)
        wf_list.append(jnp.concatenate([top, bot], axis=0))                     # (2H, 4H)
        bf_list.append(jnp.concatenate(
            [bih[l, :, :2 * H] + bhh[l, :, :2 * H],
             bih[l, :, 2 * H:], bhh[l, :, 2 * H:]], axis=1))                    # (1, 4H)
    if wf_list:
        wf = jnp.stack(wf_list)                      # (L-1, 2H, 4H)
        bf = jnp.stack(bf_list)                      # (L-1, 1, 4H)
    else:  # num_layers == 1: dummy (unused inside the kernel)
        wf = jnp.zeros((1, 2 * H, 4 * H), f32)
        bf = jnp.zeros((1, 1, 4 * H), f32)
    return row0, bias0, whh0, wf, bf


def from_states_to_voice_forward(params, previous_state, next_state, timesteps):
    # previous_state / next_state: (num_layers, batch, D_state)   (torch layout)
    num_layers, batch, _ = previous_state.shape
    hidden = params['wc'].shape[1]
    bf16 = jnp.bfloat16

    row0, bias0, whh0, wf, bf = _fuse_params(params, num_layers, hidden)

    operands = (previous_state, next_state,
                params['wc'].astype(bf16), params['bc'],
                row0, bias0,
                whh0.astype(bf16), wf.astype(bf16), bf,
                params['w1'], params['b1'])

    kernel = _make_kernel(num_layers, batch, hidden, timesteps)
    voices_bt = pl.pallas_call(
        kernel,
        grid=(1,),
        in_specs=[_full_spec(x.shape) for x in operands],
        out_specs=_full_spec((batch, timesteps)),
        out_shape=jax.ShapeDtypeStruct((batch, timesteps), jnp.float32),
        compiler_params=pltpu.CompilerParams(
            dimension_semantics=("arbitrary",),
            vmem_limit_bytes=4 << 20),      # ~100 KB actual footprint; 4 MiB is plenty
    )(*operands)

    # back to torch convention: (timesteps, batch, 1)
    return jnp.transpose(voices_bt)[:, :, None]


# ---------------- Deterministic parameter init ----------------
def init_params(key, num_layers, d_state, hidden):
    H = hidden
    keys = jax.random.split(key, 10)
    scale = 0.1
    return {
        # stored pre-transposed vs torch: wc == torch_compact_W.T, etc.
        'wc': scale * jax.random.normal(keys[0], (d_state, H), jnp.float32),
        'bc': scale * jax.random.normal(keys[1], (1, H), jnp.float32),
        'w0': scale * jax.random.normal(keys[2], (1, H), jnp.float32),   # scale[0].W.T
        'b0': scale * jax.random.normal(keys[3], (1, H), jnp.float32),
        'w1': scale * jax.random.normal(keys[4], (1, H), jnp.float32),   # scale[1].W
        'b1': scale * jax.random.normal(keys[5], (1, 1), jnp.float32),
        # GRU weights per layer: wih[l] == torch W_ih_l.T (cols ordered r|z|n)
        'wih': scale * jax.random.normal(keys[6], (num_layers, H, 3 * H), jnp.float32),
        'whh': scale * jax.random.normal(keys[7], (num_layers, H, 3 * H), jnp.float32),
        'bih': scale * jax.random.normal(keys[8], (num_layers, 1, 3 * H), jnp.float32),
        'bhh': scale * jax.random.normal(keys[9], (num_layers, 1, 3 * H), jnp.float32),
    }


# ---------------- Pure-JAX f32 reference (mirrors the torch forward, unfused) ----------------
def reference_forward(params, previous_state, next_state, timesteps):
    num_layers, batch, _ = previous_state.shape
    H = params['wc'].shape[1]
    cp = jnp.tanh(previous_state @ params['wc'] + params['bc'])
    cn = jnp.tanh(next_state @ params['wc'] + params['bc'])
    states = cn - cp                                    # (num_layers, batch, H)
    voice = jnp.zeros((batch, 1), jnp.float32)
    outs = []
    for _ in range(timesteps):
        x = voice * params['w0'] + params['b0']
        new_states = []
        for l in range(num_layers):
            h = states[l]
            gi = x @ params['wih'][l] + params['bih'][l]
            gh = h @ params['whh'][l] + params['bhh'][l]
            r = jax.nn.sigmoid(gi[:, :H] + gh[:, :H])
            z = jax.nn.sigmoid(gi[:, H:2 * H] + gh[:, H:2 * H])
            n = jnp.tanh(gi[:, 2 * H:] + r * gh[:, 2 * H:])
            h_new = (1.0 - z) * n + z * h
            new_states.append(h_new)
            x = h_new
        states = jnp.stack(new_states)
        voice = jnp.sum(x * params['w1'], axis=-1, keepdims=True) + params['b1']
        outs.append(voice[None])                        # (1, batch, 1)
    return jnp.concatenate(outs, axis=0)                # (timesteps, batch, 1)


if __name__ == "__main__":
    key = jax.random.PRNGKey(0)
    pkey, k1, k2 = jax.random.split(key, 3)

    NUM_LAYERS, BATCH, D_STATE, HIDDEN, TIMESTEPS = 2, 2, 48, 32, 8
    params = init_params(pkey, NUM_LAYERS, D_STATE, HIDDEN)
    previous_state = jax.random.normal(k1, (NUM_LAYERS, BATCH, D_STATE), jnp.float32)
    next_state = jax.random.normal(k2, (NUM_LAYERS, BATCH, D_STATE), jnp.float32)

    voices = from_states_to_voice_forward(params, previous_state, next_state, TIMESTEPS)
    jax.block_until_ready(voices)
    assert voices.shape == (TIMESTEPS, BATCH, 1), voices.shape

    ref = reference_forward(params, previous_state, next_state, TIMESTEPS)
    max_err = float(jnp.max(jnp.abs(voices - ref)))
    assert max_err < 5e-2, max_err
    print("KERNEL_OK")
</pallas_src>

<mosaic_0001>
module attributes {stable_mosaic.version = 11 : i64} {
  func.func @kernel(%arg0: i32, %arg1: memref<2x2x48xf32, #tpu.memory_space<vmem>>, %arg2: memref<2x2x48xf32, #tpu.memory_space<vmem>>, %arg3: memref<48x32xbf16, #tpu.memory_space<vmem>>, %arg4: memref<1x32xf32, #tpu.memory_space<vmem>>, %arg5: memref<1x128xf32, #tpu.memory_space<vmem>>, %arg6: memref<1x128xf32, #tpu.memory_space<vmem>>, %arg7: memref<32x128xbf16, #tpu.memory_space<vmem>>, %arg8: memref<1x64x128xbf16, #tpu.memory_space<vmem>>, %arg9: memref<1x1x128xf32, #tpu.memory_space<vmem>>, %arg10: memref<1x32xf32, #tpu.memory_space<vmem>>, %arg11: memref<1x1xf32, #tpu.memory_space<vmem>>, %arg12: memref<2x8xf32, #tpu.memory_space<vmem>>) attributes {dimension_semantics = [#tpu.dimension_semantics<arbitrary>], iteration_bounds = array<i64: 1>, scalar_prefetch = 0 : i64, scratch_operands = 0 : i64, tpu.core_type = #tpu.core_type<tc>, window_params = [{pipeline_mode = #tpu.pipeline_mode<synchronous>, transform_indices = @transform_0, window_bounds = array<i64: 2, 2, 48>}, {pipeline_mode = #tpu.pipeline_mode<synchronous>, transform_indices = @transform_1, window_bounds = array<i64: 2, 2, 48>}, {pipeline_mode = #tpu.pipeline_mode<synchronous>, transform_indices = @transform_2, window_bounds = array<i64: 48, 32>}, {pipeline_mode = #tpu.pipeline_mode<synchronous>, transform_indices = @transform_3, window_bounds = array<i64: 1, 32>}, {pipeline_mode = #tpu.pipeline_mode<synchronous>, transform_indices = @transform_4, window_bounds = array<i64: 1, 128>}, {pipeline_mode = #tpu.pipeline_mode<synchronous>, transform_indices = @transform_5, window_bounds = array<i64: 1, 128>}, {pipeline_mode = #tpu.pipeline_mode<synchronous>, transform_indices = @transform_6, window_bounds = array<i64: 32, 128>}, {pipeline_mode = #tpu.pipeline_mode<synchronous>, transform_indices = @transform_7, window_bounds = array<i64: 1, 64, 128>}, {pipeline_mode = #tpu.pipeline_mode<synchronous>, transform_indices = @transform_8, window_bounds = array<i64: 1, 1, 128>}, {pipeline_mode = #tpu.pipeline_mode<synchronous>, transform_indices = @transform_9, window_bounds = array<i64: 1, 32>}, {pipeline_mode = #tpu.pipeline_mode<synchronous>, transform_indices = @transform_10, window_bounds = array<i64: 1, 1>}, {pipeline_mode = #tpu.pipeline_mode<synchronous>, transform_indices = @transform_11, window_bounds = array<i64: 2, 8>}]} {
    %c0 = arith.constant 0 : index
    %c0_0 = arith.constant 0 : index
    %0 = vector.load %arg3[%c0, %c0_0] : memref<48x32xbf16, #tpu.memory_space<vmem>>, vector<48x32xbf16>
    %c0_1 = arith.constant 0 : index
    %c0_2 = arith.constant 0 : index
    %1 = vector.load %arg4[%c0_1, %c0_2] : memref<1x32xf32, #tpu.memory_space<vmem>>, vector<1x32xf32>
    %c0_3 = arith.constant 0 : index
    %c0_4 = arith.constant 0 : index
    %c0_5 = arith.constant 0 : index
    %2 = vector.load %arg1[%c0_3, %c0_4, %c0_5] : memref<2x2x48xf32, #tpu.memory_space<vmem>>, vector<1x2x48xf32>
    %3 = vector.shape_cast %2 : vector<1x2x48xf32> to vector<2x48xf32>
    %4 = arith.truncf %3 : vector<2x48xf32> to vector<2x48xbf16>
    %cst = arith.constant dense<0.000000e+00> : vector<2x32xf32>
    %5 = tpu.matmul %4, %0, %cst {dimension_numbers = #tpu.dot_dimension_numbers<[1], [0], [0], [1], [0, 0, 1, 1], [], []>} : vector<2x48xbf16>, vector<48x32xbf16>, vector<2x32xf32> -> vector<2x32xf32>
    %6 = vector.broadcast %1 : vector<1x32xf32> to vector<2x32xf32>
    %7 = arith.addf %5, %6 : vector<2x32xf32>
    %8 = math.tanh %7 : vector<2x32xf32>
    %c0_6 = arith.constant 0 : index
    %c0_7 = arith.constant 0 : index
    %c0_8 = arith.constant 0 : index
    %9 = vector.load %arg2[%c0_6, %c0_7, %c0_8] : memref<2x2x48xf32, #tpu.memory_space<vmem>>, vector<1x2x48xf32>
    %10 = vector.shape_cast %9 : vector<1x2x48xf32> to vector<2x48xf32>
    %11 = arith.truncf %10 : vector<2x48xf32> to vector<2x48xbf16>
    %cst_9 = arith.constant dense<0.000000e+00> : vector<2x32xf32>
    %12 = tpu.matmul %11, %0, %cst_9 {dimension_numbers = #tpu.dot_dimension_numbers<[1], [0], [0], [1], [0, 0, 1, 1], [], []>} : vector<2x48xbf16>, vector<48x32xbf16>, vector<2x32xf32> -> vector<2x32xf32>
    %13 = vector.broadcast %1 : vector<1x32xf32> to vector<2x32xf32>
    %14 = arith.addf %12, %13 : vector<2x32xf32>
    %15 = math.tanh %14 : vector<2x32xf32>
    %16 = arith.subf %15, %8 : vector<2x32xf32>
    %c1 = arith.constant 1 : index
    %c0_10 = arith.constant 0 : index
    %c0_11 = arith.constant 0 : index
    %17 = vector.load %arg1[%c1, %c0_10, %c0_11] : memref<2x2x48xf32, #tpu.memory_space<vmem>>, vector<1x2x48xf32>
    %18 = vector.shape_cast %17 : vector<1x2x48xf32> to vector<2x48xf32>
    %19 = arith.truncf %18 : vector<2x48xf32> to vector<2x48xbf16>
    %cst_12 = arith.constant dense<0.000000e+00> : vector<2x32xf32>
    %20 = tpu.matmul %19, %0, %cst_12 {dimension_numbers = #tpu.dot_dimension_numbers<[1], [0], [0], [1], [0, 0, 1, 1], [], []>} : vector<2x48xbf16>, vector<48x32xbf16>, vector<2x32xf32> -> vector<2x32xf32>
    %21 = vector.broadcast %1 : vector<1x32xf32> to vector<2x32xf32>
    %22 = arith.addf %20, %21 : vector<2x32xf32>
    %23 = math.tanh %22 : vector<2x32xf32>
    %c1_13 = arith.constant 1 : index
    %c0_14 = arith.constant 0 : index
    %c0_15 = arith.constant 0 : index
    %24 = vector.load %arg2[%c1_13, %c0_14, %c0_15] : memref<2x2x48xf32, #tpu.memory_space<vmem>>, vector<1x2x48xf32>
    %25 = vector.shape_cast %24 : vector<1x2x48xf32> to vector<2x48xf32>
    %26 = arith.truncf %25 : vector<2x48xf32> to vector<2x48xbf16>
    %cst_16 = arith.constant dense<0.000000e+00> : vector<2x32xf32>
    %27 = tpu.matmul %26, %0, %cst_16 {dimension_numbers = #tpu.dot_dimension_numbers<[1], [0], [0], [1], [0, 0, 1, 1], [], []>} : vector<2x48xbf16>, vector<48x32xbf16>, vector<2x32xf32> -> vector<2x32xf32>
    %28 = vector.broadcast %1 : vector<1x32xf32> to vector<2x32xf32>
    %29 = arith.addf %27, %28 : vector<2x32xf32>
    %30 = math.tanh %29 : vector<2x32xf32>
    %31 = arith.subf %30, %23 : vector<2x32xf32>
    %c0_17 = arith.constant 0 : index
    %c0_18 = arith.constant 0 : index
    %32 = vector.load %arg5[%c0_17, %c0_18] : memref<1x128xf32, #tpu.memory_space<vmem>>, vector<1x128xf32>
    %c0_19 = arith.constant 0 : index
    %c0_20 = arith.constant 0 : index
    %33 = vector.load %arg6[%c0_19, %c0_20] : memref<1x128xf32, #tpu.memory_space<vmem>>, vector<1x128xf32>
    %c0_21 = arith.constant 0 : index
    %c0_22 = arith.constant 0 : index
    %34 = vector.load %arg7[%c0_21, %c0_22] : memref<32x128xbf16, #tpu.memory_space<vmem>>, vector<32x128xbf16>
    %c0_23 = arith.constant 0 : index
    %c0_24 = arith.constant 0 : index
    %35 = vector.load %arg10[%c0_23, %c0_24] : memref<1x32xf32, #tpu.memory_space<vmem>>, vector<1x32xf32>
    %c0_25 = arith.constant 0 : index
    %c0_26 = arith.constant 0 : index
    %36 = vector.load %arg11[%c0_25, %c0_26] : memref<1x1xf32, #tpu.memory_space<vmem>>, vector<1x1xf32>
    %cst_27 = arith.constant 0.000000e+00 : f32
    %37 = vector.broadcast %cst_27 : f32 to vector<2x1xf32>
    %38 = vector.broadcast %37 : vector<2x1xf32> to vector<2x128xf32>
    %39 = vector.broadcast %32 : vector<1x128xf32> to vector<2x128xf32>
    %40 = arith.mulf %38, %39 : vector<2x128xf32>
    %41 = vector.broadcast %33 : vector<1x128xf32> to vector<2x128xf32>
    %42 = arith.addf %40, %41 : vector<2x128xf32>
    %43 = arith.truncf %16 : vector<2x32xf32> to vector<2x32xbf16>
    %cst_28 = arith.constant dense<0.000000e+00> : vector<2x128xf32>
    %44 = tpu.matmul %43, %34, %cst_28 {dimension_numbers = #tpu.dot_dimension_numbers<[1], [0], [0], [1], [0, 0, 1, 1], [], []>} : vector<2x32xbf16>, vector<32x128xbf16>, vector<2x128xf32> -> vector<2x128xf32>
    %45 = arith.addf %42, %44 : vector<2x128xf32>
    %46 = vector.extract_strided_slice %45 {offsets = [0, 0], sizes = [2, 64], strides = [1, 1]} : vector<2x128xf32> to vector<2x64xf32>
    %47 = arith.negf %46 : vector<2x64xf32>
    %48 = math.exp %47 : vector<2x64xf32>
    %cst_29 = arith.constant 1.000000e+00 : f32
    %49 = vector.broadcast %cst_29 : f32 to vector<2x64xf32>
    %50 = arith.addf %49, %48 : vector<2x64xf32>
    %51 = arith.divf %49, %50 : vector<2x64xf32>
    %52 = vector.extract_strided_slice %51 {offsets = [0, 0], sizes = [2, 32], strides = [1, 1]} : vector<2x64xf32> to vector<2x32xf32>
    %53 = vector.extract_strided_slice %51 {offsets = [0, 32], sizes = [2, 32], strides = [1, 1]} : vector<2x64xf32> to vector<2x32xf32>
    %54 = vector.extract_strided_slice %45 {offsets = [0, 64], sizes = [2, 32], strides = [1, 1]} : vector<2x128xf32> to vector<2x32xf32>
    %55 = vector.extract_strided_slice %45 {offsets = [0, 96], sizes = [2, 32], strides = [1, 1]} : vector<2x128xf32> to vector<2x32xf32>
    %56 = arith.mulf %52, %55 : vector<2x32xf32>
    %57 = arith.addf %54, %56 : vector<2x32xf32>
    %58 = math.tanh %57 : vector<2x32xf32>
    %cst_30 = arith.constant 1.000000e+00 : f32
    %59 = vector.broadcast %cst_30 : f32 to vector<2x32xf32>
    %60 = arith.subf %59, %53 : vector<2x32xf32>
    %61 = arith.mulf %60, %58 : vector<2x32xf32>
    %62 = arith.mulf %53, %16 : vector<2x32xf32>
    %63 = arith.addf %61, %62 : vector<2x32xf32>
    %64 = tpu.concatenate %63, %31 in 1 : vector<2x32xf32>, vector<2x32xf32> -> vector<2x64xf32>
    %65 = arith.truncf %64 : vector<2x64xf32> to vector<2x64xbf16>
    %c0_31 = arith.constant 0 : index
    %c0_32 = arith.constant 0 : index
    %c0_33 = arith.constant 0 : index
    %66 = vector.load %arg8[%c0_31, %c0_32, %c0_33] : memref<1x64x128xbf16, #tpu.memory_space<vmem>>, vector<1x64x128xbf16>
    %67 = vector.shape_cast %66 : vector<1x64x128xbf16> to vector<64x128xbf16>
    %cst_34 = arith.constant dense<0.000000e+00> : vector<2x128xf32>
    %68 = tpu.matmul %65, %67, %cst_34 {dimension_numbers = #tpu.dot_dimension_numbers<[1], [0], [0], [1], [0, 0, 1, 1], [], []>} : vector<2x64xbf16>, vector<64x128xbf16>, vector<2x128xf32> -> vector<2x128xf32>
    %c0_35 = arith.constant 0 : index
    %c0_36 = arith.constant 0 : index
    %c0_37 = arith.constant 0 : index
    %69 = vector.load %arg9[%c0_35, %c0_36, %c0_37] : memref<1x1x128xf32, #tpu.memory_space<vmem>>, vector<1x1x128xf32>
    %70 = vector.shape_cast %69 : vector<1x1x128xf32> to vector<1x128xf32>
    %71 = vector.broadcast %70 : vector<1x128xf32> to vector<2x128xf32>
    %72 = arith.addf %68, %71 : vector<2x128xf32>
    %73 = vector.extract_strided_slice %72 {offsets = [0, 0], sizes = [2, 64], strides = [1, 1]} : vector<2x128xf32> to vector<2x64xf32>
    %74 = arith.negf %73 : vector<2x64xf32>
    %75 = math.exp %74 : vector<2x64xf32>
    %cst_38 = arith.constant 1.000000e+00 : f32
    %76 = vector.broadcast %cst_38 : f32 to vector<2x64xf32>
    %77 = arith.addf %76, %75 : vector<2x64xf32>
    %78 = arith.divf %76, %77 : vector<2x64xf32>
    %79 = vector.extract_strided_slice %78 {offsets = [0, 0], sizes = [2, 32], strides = [1, 1]} : vector<2x64xf32> to vector<2x32xf32>
    %80 = vector.extract_strided_slice %78 {offsets = [0, 32], sizes = [2, 32], strides = [1, 1]} : vector<2x64xf32> to vector<2x32xf32>
    %81 = vector.extract_strided_slice %72 {offsets = [0, 64], sizes = [2, 32], strides = [1, 1]} : vector<2x128xf32> to vector<2x32xf32>
    %82 = vector.extract_strided_slice %72 {offsets = [0, 96], sizes = [2, 32], strides = [1, 1]} : vector<2x128xf32> to vector<2x32xf32>
    %83 = arith.mulf %79, %82 : vector<2x32xf32>
    %84 = arith.addf %81, %83 : vector<2x32xf32>
    %85 = math.tanh %84 : vector<2x32xf32>
    %cst_39 = arith.constant 1.000000e+00 : f32
    %86 = vector.broadcast %cst_39 : f32 to vector<2x32xf32>
    %87 = arith.subf %86, %80 : vector<2x32xf32>
    %88 = arith.mulf %87, %85 : vector<2x32xf32>
    %89 = arith.mulf %80, %31 : vector<2x32xf32>
    %90 = arith.addf %88, %89 : vector<2x32xf32>
    %91 = vector.broadcast %35 : vector<1x32xf32> to vector<2x32xf32>
    %92 = arith.mulf %90, %91 : vector<2x32xf32>
    %cst_40 = arith.constant dense<0.000000e+00> : vector<2xf32>
    %93 = vector.multi_reduction <add>, %92, %cst_40 [1] : vector<2x32xf32> to vector<2xf32>
    %94 = vector.shape_cast %93 : vector<2xf32> to vector<2x1xf32>
    %95 = vector.broadcast %36 : vector<1x1xf32> to vector<2x1xf32>
    %96 = arith.addf %94, %95 : vector<2x1xf32>
    %97 = vector.broadcast %96 : vector<2x1xf32> to vector<2x128xf32>
    %98 = vector.broadcast %32 : vector<1x128xf32> to vector<2x128xf32>
    %99 = arith.mulf %97, %98 : vector<2x128xf32>
    %100 = vector.broadcast %33 : vector<1x128xf32> to vector<2x128xf32>
    %101 = arith.addf %99, %100 : vector<2x128xf32>
    %102 = arith.truncf %63 : vector<2x32xf32> to vector<2x32xbf16>
    %cst_41 = arith.constant dense<0.000000e+00> : vector<2x128xf32>
    %103 = tpu.matmul %102, %34, %cst_41 {dimension_numbers = #tpu.dot_dimension_numbers<[1], [0], [0], [1], [0, 0, 1, 1], [], []>} : vector<2x32xbf16>, vector<32x128xbf16>, vector<2x128xf32> -> vector<2x128xf32>
    %104 = arith.addf %101, %103 : vector<2x128xf32>
    %105 = vector.extract_strided_slice %104 {offsets = [0, 0], sizes = [2, 64], strides = [1, 1]} : vector<2x128xf32> to vector<2x64xf32>
    %106 = arith.negf %105 : vector<2x64xf32>
    %107 = math.exp %106 : vector<2x64xf32>
    %cst_42 = arith.constant 1.000000e+00 : f32
    %108 = vector.broadcast %cst_42 : f32 to vector<2x64xf32>
    %109 = arith.addf %108, %107 : vector<2x64xf32>
    %110 = arith.divf %108, %109 : vector<2x64xf32>
    %111 = vector.extract_strided_slice %110 {offsets = [0, 0], sizes = [2, 32], strides = [1, 1]} : vector<2x64xf32> to vector<2x32xf32>
    %112 = vector.extract_strided_slice %110 {offsets = [0, 32], sizes = [2, 32], strides = [1, 1]} : vector<2x64xf32> to vector<2x32xf32>
    %113 = vector.extract_strided_slice %104 {offsets = [0, 64], sizes = [2, 32], strides = [1, 1]} : vector<2x128xf32> to vector<2x32xf32>
    %114 = vector.extract_strided_slice %104 {offsets = [0, 96], sizes = [2, 32], strides = [1, 1]} : vector<2x128xf32> to vector<2x32xf32>
    %115 = arith.mulf %111, %114 : vector<2x32xf32>
    %116 = arith.addf %113, %115 : vector<2x32xf32>
    %117 = math.tanh %116 : vector<2x32xf32>
    %cst_43 = arith.constant 1.000000e+00 : f32
    %118 = vector.broadcast %cst_43 : f32 to vector<2x32xf32>
    %119 = arith.subf %118, %112 : vector<2x32xf32>
    %120 = arith.mulf %119, %117 : vector<2x32xf32>
    %121 = arith.mulf %112, %63 : vector<2x32xf32>
    %122 = arith.addf %120, %121 : vector<2x32xf32>
    %123 = tpu.concatenate %122, %90 in 1 : vector<2x32xf32>, vector<2x32xf32> -> vector<2x64xf32>
    %124 = arith.truncf %123 : vector<2x64xf32> to vector<2x64xbf16>
    %c0_44 = arith.constant 0 : index
    %c0_45 = arith.constant 0 : index
    %c0_46 = arith.constant 0 : index
    %125 = vector.load %arg8[%c0_44, %c0_45, %c0_46] : memref<1x64x128xbf16, #tpu.memory_space<vmem>>, vector<1x64x128xbf16>
    %126 = vector.shape_cast %125 : vector<1x64x128xbf16> to vector<64x128xbf16>
    %cst_47 = arith.constant dense<0.000000e+00> : vector<2x128xf32>
    %127 = tpu.matmul %124, %126, %cst_47 {dimension_numbers = #tpu.dot_dimension_numbers<[1], [0], [0], [1], [0, 0, 1, 1], [], []>} : vector<2x64xbf16>, vector<64x128xbf16>, vector<2x128xf32> -> vector<2x128xf32>
    %c0_48 = arith.constant 0 : index
    %c0_49 = arith.constant 0 : index
    %c0_50 = arith.constant 0 : index
    %128 = vector.load %arg9[%c0_48, %c0_49, %c0_50] : memref<1x1x128xf32, #tpu.memory_space<vmem>>, vector<1x1x128xf32>
    %129 = vector.shape_cast %128 : vector<1x1x128xf32> to vector<1x128xf32>
    %130 = vector.broadcast %129 : vector<1x128xf32> to vector<2x128xf32>
    %131 = arith.addf %127, %130 : vector<2x128xf32>
    %132 = vector.extract_strided_slice %131 {offsets = [0, 0], sizes = [2, 64], strides = [1, 1]} : vector<2x128xf32> to vector<2x64xf32>
    %133 = arith.negf %132 : vector<2x64xf32>
    %134 = math.exp %133 : vector<2x64xf32>
    %cst_51 = arith.constant 1.000000e+00 : f32
    %135 = vector.broadcast %cst_51 : f32 to vector<2x64xf32>
    %136 = arith.addf %135, %134 : vector<2x64xf32>
    %137 = arith.divf %135, %136 : vector<2x64xf32>
    %138 = vector.extract_strided_slice %137 {offsets = [0, 0], sizes = [2, 32], strides = [1, 1]} : vector<2x64xf32> to vector<2x32xf32>
    %139 = vector.extract_strided_slice %137 {offsets = [0, 32], sizes = [2, 32], strides = [1, 1]} : vector<2x64xf32> to vector<2x32xf32>
    %140 = vector.extract_strided_slice %131 {offsets = [0, 64], sizes = [2, 32], strides = [1, 1]} : vector<2x128xf32> to vector<2x32xf32>
    %141 = vector.extract_strided_slice %131 {offsets = [0, 96], sizes = [2, 32], strides = [1, 1]} : vector<2x128xf32> to vector<2x32xf32>
    %142 = arith.mulf %138, %141 : vector<2x32xf32>
    %143 = arith.addf %140, %142 : vector<2x32xf32>
    %144 = math.tanh %143 : vector<2x32xf32>
    %cst_52 = arith.constant 1.000000e+00 : f32
    %145 = vector.broadcast %cst_52 : f32 to vector<2x32xf32>
    %146 = arith.subf %145, %139 : vector<2x32xf32>
    %147 = arith.mulf %146, %144 : vector<2x32xf32>
    %148 = arith.mulf %139, %90 : vector<2x32xf32>
    %149 = arith.addf %147, %148 : vector<2x32xf32>
    %150 = vector.broadcast %35 : vector<1x32xf32> to vector<2x32xf32>
    %151 = arith.mulf %149, %150 : vector<2x32xf32>
    %cst_53 = arith.constant dense<0.000000e+00> : vector<2xf32>
    %152 = vector.multi_reduction <add>, %151, %cst_53 [1] : vector<2x32xf32> to vector<2xf32>
    %153 = vector.shape_cast %152 : vector<2xf32> to vector<2x1xf32>
    %154 = vector.broadcast %36 : vector<1x1xf32> to vector<2x1xf32>
    %155 = arith.addf %153, %154 : vector<2x1xf32>
    %156 = vector.broadcast %155 : vector<2x1xf32> to vector<2x128xf32>
    %157 = vector.broadcast %32 : vector<1x128xf32> to vector<2x128xf32>
    %158 = arith.mulf %156, %157 : vector<2x128xf32>
    %159 = vector.broadcast %33 : vector<1x128xf32> to vector<2x128xf32>
    %160 = arith.addf %158, %159 : vector<2x128xf32>
    %161 = arith.truncf %122 : vector<2x32xf32> to vector<2x32xbf16>
    %cst_54 = arith.constant dense<0.000000e+00> : vector<2x128xf32>
    %162 = tpu.matmul %161, %34, %cst_54 {dimension_numbers = #tpu.dot_dimension_numbers<[1], [0], [0], [1], [0, 0, 1, 1], [], []>} : vector<2x32xbf16>, vector<32x128xbf16>, vector<2x128xf32> -> vector<2x128xf32>
    %163 = arith.addf %160, %162 : vector<2x128xf32>
    %164 = vector.extract_strided_slice %163 {offsets = [0, 0], sizes = [2, 64], strides = [1, 1]} : vector<2x128xf32> to vector<2x64xf32>
    %165 = arith.negf %164 : vector<2x64xf32>
    %166 = math.exp %165 : vector<2x64xf32>
    %cst_55 = arith.constant 1.000000e+00 : f32
    %167 = vector.broadcast %cst_55 : f32 to vector<2x64xf32>
    %168 = arith.addf %167, %166 : vector<2x64xf32>
    %169 = arith.divf %167, %168 : vector<2x64xf32>
    %170 = vector.extract_strided_slice %169 {offsets = [0, 0], sizes = [2, 32], strides = [1, 1]} : vector<2x64xf32> to vector<2x32xf32>
    %171 = vector.extract_strided_slice %169 {offsets = [0, 32], sizes = [2, 32], strides = [1, 1]} : vector<2x64xf32> to vector<2x32xf32>
    %172 = vector.extract_strided_slice %163 {offsets = [0, 64], sizes = [2, 32], strides = [1, 1]} : vector<2x128xf32> to vector<2x32xf32>
    %173 = vector.extract_strided_slice %163 {offsets = [0, 96], sizes = [2, 32], strides = [1, 1]} : vector<2x128xf32> to vector<2x32xf32>
    %174 = arith.mulf %170, %173 : vector<2x32xf32>
    %175 = arith.addf %172, %174 : vector<2x32xf32>
    %176 = math.tanh %175 : vector<2x32xf32>
    %cst_56 = arith.constant 1.000000e+00 : f32
    %177 = vector.broadcast %cst_56 : f32 to vector<2x32xf32>
    %178 = arith.subf %177, %171 : vector<2x32xf32>
    %179 = arith.mulf %178, %176 : vector<2x32xf32>
    %180 = arith.mulf %171, %122 : vector<2x32xf32>
    %181 = arith.addf %179, %180 : vector<2x32xf32>
    %182 = tpu.concatenate %181, %149 in 1 : vector<2x32xf32>, vector<2x32xf32> -> vector<2x64xf32>
    %183 = arith.truncf %182 : vector<2x64xf32> to vector<2x64xbf16>
    %c0_57 = arith.constant 0 : index
    %c0_58 = arith.constant 0 : index
    %c0_59 = arith.constant 0 : index
    %184 = vector.load %arg8[%c0_57, %c0_58, %c0_59] : memref<1x64x128xbf16, #tpu.memory_space<vmem>>, vector<1x64x128xbf16>
    %185 = vector.shape_cast %184 : vector<1x64x128xbf16> to vector<64x128xbf16>
    %cst_60 = arith.constant dense<0.000000e+00> : vector<2x128xf32>
    %186 = tpu.matmul %183, %185, %cst_60 {dimension_numbers = #tpu.dot_dimension_numbers<[1], [0], [0], [1], [0, 0, 1, 1], [], []>} : vector<2x64xbf16>, vector<64x128xbf16>, vector<2x128xf32> -> vector<2x128xf32>
    %c0_61 = arith.constant 0 : index
    %c0_62 = arith.constant 0 : index
    %c0_63 = arith.constant 0 : index
    %187 = vector.load %arg9[%c0_61, %c0_62, %c0_63] : memref<1x1x128xf32, #tpu.memory_space<vmem>>, vector<1x1x128xf32>
    %188 = vector.shape_cast %187 : vector<1x1x128xf32> to vector<1x128xf32>
    %189 = vector.broadcast %188 : vector<1x128xf32> to vector<2x128xf32>
    %190 = arith.addf %186, %189 : vector<2x128xf32>
    %191 = vector.extract_strided_slice %190 {offsets = [0, 0], sizes = [2, 64], strides = [1, 1]} : vector<2x128xf32> to vector<2x64xf32>
    %192 = arith.negf %191 : vector<2x64xf32>
    %193 = math.exp %192 : vector<2x64xf32>
    %cst_64 = arith.constant 1.000000e+00 : f32
    %194 = vector.broadcast %cst_64 : f32 to vector<2x64xf32>
    %195 = arith.addf %194, %193 : vector<2x64xf32>
    %196 = arith.divf %194, %195 : vector<2x64xf32>
    %197 = vector.extract_strided_slice %196 {offsets = [0, 0], sizes = [2, 32], strides = [1, 1]} : vector<2x64xf32> to vector<2x32xf32>
    %198 = vector.extract_strided_slice %196 {offsets = [0, 32], sizes = [2, 32], strides = [1, 1]} : vector<2x64xf32> to vector<2x32xf32>
    %199 = vector.extract_strided_slice %190 {offsets = [0, 64], sizes = [2, 32], strides = [1, 1]} : vector<2x128xf32> to vector<2x32xf32>
    %200 = vector.extract_strided_slice %190 {offsets = [0, 96], sizes = [2, 32], strides = [1, 1]} : vector<2x128xf32> to vector<2x32xf32>
    %201 = arith.mulf %197, %200 : vector<2x32xf32>
    %202 = arith.addf %199, %201 : vector<2x32xf32>
    %203 = math.tanh %202 : vector<2x32xf32>
    %cst_65 = arith.constant 1.000000e+00 : f32
    %204 = vector.broadcast %cst_65 : f32 to vector<2x32xf32>
    %205 = arith.subf %204, %198 : vector<2x32xf32>
    %206 = arith.mulf %205, %203 : vector<2x32xf32>
    %207 = arith.mulf %198, %149 : vector<2x32xf32>
    %208 = arith.addf %206, %207 : vector<2x32xf32>
    %209 = vector.broadcast %35 : vector<1x32xf32> to vector<2x32xf32>
    %210 = arith.mulf %208, %209 : vector<2x32xf32>
    %cst_66 = arith.constant dense<0.000000e+00> : vector<2xf32>
    %211 = vector.multi_reduction <add>, %210, %cst_66 [1] : vector<2x32xf32> to vector<2xf32>
    %212 = vector.shape_cast %211 : vector<2xf32> to vector<2x1xf32>
    %213 = vector.broadcast %36 : vector<1x1xf32> to vector<2x1xf32>
    %214 = arith.addf %212, %213 : vector<2x1xf32>
    %215 = vector.broadcast %214 : vector<2x1xf32> to vector<2x128xf32>
    %216 = vector.broadcast %32 : vector<1x128xf32> to vector<2x128xf32>
    %217 = arith.mulf %215, %216 : vector<2x128xf32>
    %218 = vector.broadcast %33 : vector<1x128xf32> to vector<2x128xf32>
    %219 = arith.addf %217, %218 : vector<2x128xf32>
    %220 = arith.truncf %181 : vector<2x32xf32> to vector<2x32xbf16>
    %cst_67 = arith.constant dense<0.000000e+00> : vector<2x128xf32>
    %221 = tpu.matmul %220, %34, %cst_67 {dimension_numbers = #tpu.dot_dimension_numbers<[1], [0], [0], [1], [0, 0, 1, 1], [], []>} : vector<2x32xbf16>, vector<32x128xbf16>, vector<2x128xf32> -> vector<2x128xf32>
    %222 = arith.addf %219, %221 : vector<2x128xf32>
    %223 = vector.extract_strided_slice %222 {offsets = [0, 0], sizes = [2, 64], strides = [1, 1]} : vector<2x128xf32> to vector<2x64xf32>
    %224 = arith.negf %223 : vector<2x64xf32>
    %225 = math.exp %224 : vector<2x64xf32>
    %cst_68 = arith.constant 1.000000e+00 : f32
    %226 = vector.broadcast %cst_68 : f32 to vector<2x64xf32>
    %227 = arith.addf %226, %225 : vector<2x64xf32>
    %228 = arith.divf %226, %227 : vector<2x64xf32>
    %229 = vector.extract_strided_slice %228 {offsets = [0, 0], sizes = [2, 32], strides = [1, 1]} : vector<2x64xf32> to vector<2x32xf32>
    %230 = vector.extract_strided_slice %228 {offsets = [0, 32], sizes = [2, 32], strides = [1, 1]} : vector<2x64xf32> to vector<2x32xf32>
    %231 = vector.extract_strided_slice %222 {offsets = [0, 64], sizes = [2, 32], strides = [1, 1]} : vector<2x128xf32> to vector<2x32xf32>
    %232 = vector.extract_strided_slice %222 {offsets = [0, 96], sizes = [2, 32], strides = [1, 1]} : vector<2x128xf32> to vector<2x32xf32>
    %233 = arith.mulf %229, %232 : vector<2x32xf32>
    %234 = arith.addf %231, %233 : vector<2x32xf32>
    %235 = math.tanh %234 : vector<2x32xf32>
    %cst_69 = arith.constant 1.000000e+00 : f32
    %236 = vector.broadcast %cst_69 : f32 to vector<2x32xf32>
    %237 = arith.subf %236, %230 : vector<2x32xf32>
    %238 = arith.mulf %237, %235 : vector<2x32xf32>
    %239 = arith.mulf %230, %181 : vector<2x32xf32>
    %240 = arith.addf %238, %239 : vector<2x32xf32>
    %241 = tpu.concatenate %240, %208 in 1 : vector<2x32xf32>, vector<2x32xf32> -> vector<2x64xf32>
    %242 = arith.truncf %241 : vector<2x64xf32> to vector<2x64xbf16>
    %c0_70 = arith.constant 0 : index
    %c0_71 = arith.constant 0 : index
    %c0_72 = arith.constant 0 : index
    %243 = vector.load %arg8[%c0_70, %c0_71, %c0_72] : memref<1x64x128xbf16, #tpu.memory_space<vmem>>, vector<1x64x128xbf16>
    %244 = vector.shape_cast %243 : vector<1x64x128xbf16> to vector<64x128xbf16>
    %cst_73 = arith.constant dense<0.000000e+00> : vector<2x128xf32>
    %245 = tpu.matmul %242, %244, %cst_73 {dimension_numbers = #tpu.dot_dimension_numbers<[1], [0], [0], [1], [0, 0, 1, 1], [], []>} : vector<2x64xbf16>, vector<64x128xbf16>, vector<2x128xf32> -> vector<2x128xf32>
    %c0_74 = arith.constant 0 : index
    %c0_75 = arith.constant 0 : index
    %c0_76 = arith.constant 0 : index
    %246 = vector.load %arg9[%c0_74, %c0_75, %c0_76] : memref<1x1x128xf32, #tpu.memory_space<vmem>>, vector<1x1x128xf32>
    %247 = vector.shape_cast %246 : vector<1x1x128xf32> to vector<1x128xf32>
    %248 = vector.broadcast %247 : vector<1x128xf32> to vector<2x128xf32>
    %249 = arith.addf %245, %248 : vector<2x128xf32>
    %250 = vector.extract_strided_slice %249 {offsets = [0, 0], sizes = [2, 64], strides = [1, 1]} : vector<2x128xf32> to vector<2x64xf32>
    %251 = arith.negf %250 : vector<2x64xf32>
    %252 = math.exp %251 : vector<2x64xf32>
    %cst_77 = arith.constant 1.000000e+00 : f32
    %253 = vector.broadcast %cst_77 : f32 to vector<2x64xf32>
    %254 = arith.addf %253, %252 : vector<2x64xf32>
    %255 = arith.divf %253, %254 : vector<2x64xf32>
    %256 = vector.extract_strided_slice %255 {offsets = [0, 0], sizes = [2, 32], strides = [1, 1]} : vector<2x64xf32> to vector<2x32xf32>
    %257 = vector.extract_strided_slice %255 {offsets = [0, 32], sizes = [2, 32], strides = [1, 1]} : vector<2x64xf32> to vector<2x32xf32>
    %258 = vector.extract_strided_slice %249 {offsets = [0, 64], sizes = [2, 32], strides = [1, 1]} : vector<2x128xf32> to vector<2x32xf32>
    %259 = vector.extract_strided_slice %249 {offsets = [0, 96], sizes = [2, 32], strides = [1, 1]} : vector<2x128xf32> to vector<2x32xf32>
    %260 = arith.mulf %256, %259 : vector<2x32xf32>
    %261 = arith.addf %258, %260 : vector<2x32xf32>
    %262 = math.tanh %261 : vector<2x32xf32>
    %cst_78 = arith.constant 1.000000e+00 : f32
    %263 = vector.broadcast %cst_78 : f32 to vector<2x32xf32>
    %264 = arith.subf %263, %257 : vector<2x32xf32>
    %265 = arith.mulf %264, %262 : vector<2x32xf32>
    %266 = arith.mulf %257, %208 : vector<2x32xf32>
    %267 = arith.addf %265, %266 : vector<2x32xf32>
    %268 = vector.broadcast %35 : vector<1x32xf32> to vector<2x32xf32>
    %269 = arith.mulf %267, %268 : vector<2x32xf32>
    %cst_79 = arith.constant dense<0.000000e+00> : vector<2xf32>
    %270 = vector.multi_reduction <add>, %269, %cst_79 [1] : vector<2x32xf32> to vector<2xf32>
    %271 = vector.shape_cast %270 : vector<2xf32> to vector<2x1xf32>
    %272 = vector.broadcast %36 : vector<1x1xf32> to vector<2x1xf32>
    %273 = arith.addf %271, %272 : vector<2x1xf32>
    %274 = vector.broadcast %273 : vector<2x1xf32> to vector<2x128xf32>
    %275 = vector.broadcast %32 : vector<1x128xf32> to vector<2x128xf32>
    %276 = arith.mulf %274, %275 : vector<2x128xf32>
    %277 = vector.broadcast %33 : vector<1x128xf32> to vector<2x128xf32>
    %278 = arith.addf %276, %277 : vector<2x128xf32>
    %279 = arith.truncf %240 : vector<2x32xf32> to vector<2x32xbf16>
    %cst_80 = arith.constant dense<0.000000e+00> : vector<2x128xf32>
    %280 = tpu.matmul %279, %34, %cst_80 {dimension_numbers = #tpu.dot_dimension_numbers<[1], [0], [0], [1], [0, 0, 1, 1], [], []>} : vector<2x32xbf16>, vector<32x128xbf16>, vector<2x128xf32> -> vector<2x128xf32>
    %281 = arith.addf %278, %280 : vector<2x128xf32>
    %282 = vector.extract_strided_slice %281 {offsets = [0, 0], sizes = [2, 64], strides = [1, 1]} : vector<2x128xf32> to vector<2x64xf32>
    %283 = arith.negf %282 : vector<2x64xf32>
    %284 = math.exp %283 : vector<2x64xf32>
    %cst_81 = arith.constant 1.000000e+00 : f32
    %285 = vector.broadcast %cst_81 : f32 to vector<2x64xf32>
    %286 = arith.addf %285, %284 : vector<2x64xf32>
    %287 = arith.divf %285, %286 : vector<2x64xf32>
    %288 = vector.extract_strided_slice %287 {offsets = [0, 0], sizes = [2, 32], strides = [1, 1]} : vector<2x64xf32> to vector<2x32xf32>
    %289 = vector.extract_strided_slice %287 {offsets = [0, 32], sizes = [2, 32], strides = [1, 1]} : vector<2x64xf32> to vector<2x32xf32>
    %290 = vector.extract_strided_slice %281 {offsets = [0, 64], sizes = [2, 32], strides = [1, 1]} : vector<2x128xf32> to vector<2x32xf32>
    %291 = vector.extract_strided_slice %281 {offsets = [0, 96], sizes = [2, 32], strides = [1, 1]} : vector<2x128xf32> to vector<2x32xf32>
    %292 = arith.mulf %288, %291 : vector<2x32xf32>
    %293 = arith.addf %290, %292 : vector<2x32xf32>
    %294 = math.tanh %293 : vector<2x32xf32>
    %cst_82 = arith.constant 1.000000e+00 : f32
    %295 = vector.broadcast %cst_82 : f32 to vector<2x32xf32>
    %296 = arith.subf %295, %289 : vector<2x32xf32>
    %297 = arith.mulf %296, %294 : vector<2x32xf32>
    %298 = arith.mulf %289, %240 : vector<2x32xf32>
    %299 = arith.addf %297, %298 : vector<2x32xf32>
    %300 = tpu.concatenate %299, %267 in 1 : vector<2x32xf32>, vector<2x32xf32> -> vector<2x64xf32>
    %301 = arith.truncf %300 : vector<2x64xf32> to vector<2x64xbf16>
    %c0_83 = arith.constant 0 : index
    %c0_84 = arith.constant 0 : index
    %c0_85 = arith.constant 0 : index
    %302 = vector.load %arg8[%c0_83, %c0_84, %c0_85] : memref<1x64x128xbf16, #tpu.memory_space<vmem>>, vector<1x64x128xbf16>
    %303 = vector.shape_cast %302 : vector<1x64x128xbf16> to vector<64x128xbf16>
    %cst_86 = arith.constant dense<0.000000e+00> : vector<2x128xf32>
    %304 = tpu.matmul %301, %303, %cst_86 {dimension_numbers = #tpu.dot_dimension_numbers<[1], [0], [0], [1], [0, 0, 1, 1], [], []>} : vector<2x64xbf16>, vector<64x128xbf16>, vector<2x128xf32> -> vector<2x128xf32>
    %c0_87 = arith.constant 0 : index
    %c0_88 = arith.constant 0 : index
    %c0_89 = arith.constant 0 : index
    %305 = vector.load %arg9[%c0_87, %c0_88, %c0_89] : memref<1x1x128xf32, #tpu.memory_space<vmem>>, vector<1x1x128xf32>
    %306 = vector.shape_cast %305 : vector<1x1x128xf32> to vector<1x128xf32>
    %307 = vector.broadcast %306 : vector<1x128xf32> to vector<2x128xf32>
    %308 = arith.addf %304, %307 : vector<2x128xf32>
    %309 = vector.extract_strided_slice %308 {offsets = [0, 0], sizes = [2, 64], strides = [1, 1]} : vector<2x128xf32> to vector<2x64xf32>
    %310 = arith.negf %309 : vector<2x64xf32>
    %311 = math.exp %310 : vector<2x64xf32>
    %cst_90 = arith.constant 1.000000e+00 : f32
    %312 = vector.broadcast %cst_90 : f32 to vector<2x64xf32>
    %313 = arith.addf %312, %311 : vector<2x64xf32>
    %314 = arith.divf %312, %313 : vector<2x64xf32>
    %315 = vector.extract_strided_slice %314 {offsets = [0, 0], sizes = [2, 32], strides = [1, 1]} : vector<2x64xf32> to vector<2x32xf32>
    %316 = vector.extract_strided_slice %314 {offsets = [0, 32], sizes = [2, 32], strides = [1, 1]} : vector<2x64xf32> to vector<2x32xf32>
    %317 = vector.extract_strided_slice %308 {offsets = [0, 64], sizes = [2, 32], strides = [1, 1]} : vector<2x128xf32> to vector<2x32xf32>
    %318 = vector.extract_strided_slice %308 {offsets = [0, 96], sizes = [2, 32], strides = [1, 1]} : vector<2x128xf32> to vector<2x32xf32>
    %319 = arith.mulf %315, %318 : vector<2x32xf32>
    %320 = arith.addf %317, %319 : vector<2x32xf32>
    %321 = math.tanh %320 : vector<2x32xf32>
    %cst_91 = arith.constant 1.000000e+00 : f32
    %322 = vector.broadcast %cst_91 : f32 to vector<2x32xf32>
    %323 = arith.subf %322, %316 : vector<2x32xf32>
    %324 = arith.mulf %323, %321 : vector<2x32xf32>
    %325 = arith.mulf %316, %267 : vector<2x32xf32>
    %326 = arith.addf %324, %325 : vector<2x32xf32>
    %327 = vector.broadcast %35 : vector<1x32xf32> to vector<2x32xf32>
    %328 = arith.mulf %326, %327 : vector<2x32xf32>
    %cst_92 = arith.constant dense<0.000000e+00> : vector<2xf32>
    %329 = vector.multi_reduction <add>, %328, %cst_92 [1] : vector<2x32xf32> to vector<2xf32>
    %330 = vector.shape_cast %329 : vector<2xf32> to vector<2x1xf32>
    %331 = vector.broadcast %36 : vector<1x1xf32> to vector<2x1xf32>
    %332 = arith.addf %330, %331 : vector<2x1xf32>
    %333 = vector.broadcast %332 : vector<2x1xf32> to vector<2x128xf32>
    %334 = vector.broadcast %32 : vector<1x128xf32> to vector<2x128xf32>
    %335 = arith.mulf %333, %334 : vector<2x128xf32>
    %336 = vector.broadcast %33 : vector<1x128xf32> to vector<2x128xf32>
    %337 = arith.addf %335, %336 : vector<2x128xf32>
    %338 = arith.truncf %299 : vector<2x32xf32> to vector<2x32xbf16>
    %cst_93 = arith.constant dense<0.000000e+00> : vector<2x128xf32>
    %339 = tpu.matmul %338, %34, %cst_93 {dimension_numbers = #tpu.dot_dimension_numbers<[1], [0], [0], [1], [0, 0, 1, 1], [], []>} : vector<2x32xbf16>, vector<32x128xbf16>, vector<2x128xf32> -> vector<2x128xf32>
    %340 = arith.addf %337, %339 : vector<2x128xf32>
    %341 = vector.extract_strided_slice %340 {offsets = [0, 0], sizes = [2, 64], strides = [1, 1]} : vector<2x128xf32> to vector<2x64xf32>
    %342 = arith.negf %341 : vector<2x64xf32>
    %343 = math.exp %342 : vector<2x64xf32>
    %cst_94 = arith.constant 1.000000e+00 : f32
    %344 = vector.broadcast %cst_94 : f32 to vector<2x64xf32>
    %345 = arith.addf %344, %343 : vector<2x64xf32>
    %346 = arith.divf %344, %345 : vector<2x64xf32>
    %347 = vector.extract_strided_slice %346 {offsets = [0, 0], sizes = [2, 32], strides = [1, 1]} : vector<2x64xf32> to vector<2x32xf32>
    %348 = vector.extract_strided_slice %346 {offsets = [0, 32], sizes = [2, 32], strides = [1, 1]} : vector<2x64xf32> to vector<2x32xf32>
    %349 = vector.extract_strided_slice %340 {offsets = [0, 64], sizes = [2, 32], strides = [1, 1]} : vector<2x128xf32> to vector<2x32xf32>
    %350 = vector.extract_strided_slice %340 {offsets = [0, 96], sizes = [2, 32], strides = [1, 1]} : vector<2x128xf32> to vector<2x32xf32>
    %351 = arith.mulf %347, %350 : vector<2x32xf32>
    %352 = arith.addf %349, %351 : vector<2x32xf32>
    %353 = math.tanh %352 : vector<2x32xf32>
    %cst_95 = arith.constant 1.000000e+00 : f32
    %354 = vector.broadcast %cst_95 : f32 to vector<2x32xf32>
    %355 = arith.subf %354, %348 : vector<2x32xf32>
    %356 = arith.mulf %355, %353 : vector<2x32xf32>
    %357 = arith.mulf %348, %299 : vector<2x32xf32>
    %358 = arith.addf %356, %357 : vector<2x32xf32>
    %359 = tpu.concatenate %358, %326 in 1 : vector<2x32xf32>, vector<2x32xf32> -> vector<2x64xf32>
    %360 = arith.truncf %359 : vector<2x64xf32> to vector<2x64xbf16>
    %c0_96 = arith.constant 0 : index
    %c0_97 = arith.constant 0 : index
    %c0_98 = arith.constant 0 : index
    %361 = vector.load %arg8[%c0_96, %c0_97, %c0_98] : memref<1x64x128xbf16, #tpu.memory_space<vmem>>, vector<1x64x128xbf16>
    %362 = vector.shape_cast %361 : vector<1x64x128xbf16> to vector<64x128xbf16>
    %cst_99 = arith.constant dense<0.000000e+00> : vector<2x128xf32>
    %363 = tpu.matmul %360, %362, %cst_99 {dimension_numbers = #tpu.dot_dimension_numbers<[1], [0], [0], [1], [0, 0, 1, 1], [], []>} : vector<2x64xbf16>, vector<64x128xbf16>, vector<2x128xf32> -> vector<2x128xf32>
    %c0_100 = arith.constant 0 : index
    %c0_101 = arith.constant 0 : index
    %c0_102 = arith.constant 0 : index
    %364 = vector.load %arg9[%c0_100, %c0_101, %c0_102] : memref<1x1x128xf32, #tpu.memory_space<vmem>>, vector<1x1x128xf32>
    %365 = vector.shape_cast %364 : vector<1x1x128xf32> to vector<1x128xf32>
    %366 = vector.broadcast %365 : vector<1x128xf32> to vector<2x128xf32>
    %367 = arith.addf %363, %366 : vector<2x128xf32>
    %368 = vector.extract_strided_slice %367 {offsets = [0, 0], sizes = [2, 64], strides = [1, 1]} : vector<2x128xf32> to vector<2x64xf32>
    %369 = arith.negf %368 : vector<2x64xf32>
    %370 = math.exp %369 : vector<2x64xf32>
    %cst_103 = arith.constant 1.000000e+00 : f32
    %371 = vector.broadcast %cst_103 : f32 to vector<2x64xf32>
    %372 = arith.addf %371, %370 : vector<2x64xf32>
    %373 = arith.divf %371, %372 : vector<2x64xf32>
    %374 = vector.extract_strided_slice %373 {offsets = [0, 0], sizes = [2, 32], strides = [1, 1]} : vector<2x64xf32> to vector<2x32xf32>
    %375 = vector.extract_strided_slice %373 {offsets = [0, 32], sizes = [2, 32], strides = [1, 1]} : vector<2x64xf32> to vector<2x32xf32>
    %376 = vector.extract_strided_slice %367 {offsets = [0, 64], sizes = [2, 32], strides = [1, 1]} : vector<2x128xf32> to vector<2x32xf32>
    %377 = vector.extract_strided_slice %367 {offsets = [0, 96], sizes = [2, 32], strides = [1, 1]} : vector<2x128xf32> to vector<2x32xf32>
    %378 = arith.mulf %374, %377 : vector<2x32xf32>
    %379 = arith.addf %376, %378 : vector<2x32xf32>
    %380 = math.tanh %379 : vector<2x32xf32>
    %cst_104 = arith.constant 1.000000e+00 : f32
    %381 = vector.broadcast %cst_104 : f32 to vector<2x32xf32>
    %382 = arith.subf %381, %375 : vector<2x32xf32>
    %383 = arith.mulf %382, %380 : vector<2x32xf32>
    %384 = arith.mulf %375, %326 : vector<2x32xf32>
    %385 = arith.addf %383, %384 : vector<2x32xf32>
    %386 = vector.broadcast %35 : vector<1x32xf32> to vector<2x32xf32>
    %387 = arith.mulf %385, %386 : vector<2x32xf32>
    %cst_105 = arith.constant dense<0.000000e+00> : vector<2xf32>
    %388 = vector.multi_reduction <add>, %387, %cst_105 [1] : vector<2x32xf32> to vector<2xf32>
    %389 = vector.shape_cast %388 : vector<2xf32> to vector<2x1xf32>
    %390 = vector.broadcast %36 : vector<1x1xf32> to vector<2x1xf32>
    %391 = arith.addf %389, %390 : vector<2x1xf32>
    %392 = vector.broadcast %391 : vector<2x1xf32> to vector<2x128xf32>
    %393 = vector.broadcast %32 : vector<1x128xf32> to vector<2x128xf32>
    %394 = arith.mulf %392, %393 : vector<2x128xf32>
    %395 = vector.broadcast %33 : vector<1x128xf32> to vector<2x128xf32>
    %396 = arith.addf %394, %395 : vector<2x128xf32>
    %397 = arith.truncf %358 : vector<2x32xf32> to vector<2x32xbf16>
    %cst_106 = arith.constant dense<0.000000e+00> : vector<2x128xf32>
    %398 = tpu.matmul %397, %34, %cst_106 {dimension_numbers = #tpu.dot_dimension_numbers<[1], [0], [0], [1], [0, 0, 1, 1], [], []>} : vector<2x32xbf16>, vector<32x128xbf16>, vector<2x128xf32> -> vector<2x128xf32>
    %399 = arith.addf %396, %398 : vector<2x128xf32>
    %400 = vector.extract_strided_slice %399 {offsets = [0, 0], sizes = [2, 64], strides = [1, 1]} : vector<2x128xf32> to vector<2x64xf32>
    %401 = arith.negf %400 : vector<2x64xf32>
    %402 = math.exp %401 : vector<2x64xf32>
    %cst_107 = arith.constant 1.000000e+00 : f32
    %403 = vector.broadcast %cst_107 : f32 to vector<2x64xf32>
    %404 = arith.addf %403, %402 : vector<2x64xf32>
    %405 = arith.divf %403, %404 : vector<2x64xf32>
    %406 = vector.extract_strided_slice %405 {offsets = [0, 0], sizes = [2, 32], strides = [1, 1]} : vector<2x64xf32> to vector<2x32xf32>
    %407 = vector.extract_strided_slice %405 {offsets = [0, 32], sizes = [2, 32], strides = [1, 1]} : vector<2x64xf32> to vector<2x32xf32>
    %408 = vector.extract_strided_slice %399 {offsets = [0, 64], sizes = [2, 32], strides = [1, 1]} : vector<2x128xf32> to vector<2x32xf32>
    %409 = vector.extract_strided_slice %399 {offsets = [0, 96], sizes = [2, 32], strides = [1, 1]} : vector<2x128xf32> to vector<2x32xf32>
    %410 = arith.mulf %406, %409 : vector<2x32xf32>
    %411 = arith.addf %408, %410 : vector<2x32xf32>
    %412 = math.tanh %411 : vector<2x32xf32>
    %cst_108 = arith.constant 1.000000e+00 : f32
    %413 = vector.broadcast %cst_108 : f32 to vector<2x32xf32>
    %414 = arith.subf %413, %407 : vector<2x32xf32>
    %415 = arith.mulf %414, %412 : vector<2x32xf32>
    %416 = arith.mulf %407, %358 : vector<2x32xf32>
    %417 = arith.addf %415, %416 : vector<2x32xf32>
    %418 = tpu.concatenate %417, %385 in 1 : vector<2x32xf32>, vector<2x32xf32> -> vector<2x64xf32>
    %419 = arith.truncf %418 : vector<2x64xf32> to vector<2x64xbf16>
    %c0_109 = arith.constant 0 : index
    %c0_110 = arith.constant 0 : index
    %c0_111 = arith.constant 0 : index
    %420 = vector.load %arg8[%c0_109, %c0_110, %c0_111] : memref<1x64x128xbf16, #tpu.memory_space<vmem>>, vector<1x64x128xbf16>
    %421 = vector.shape_cast %420 : vector<1x64x128xbf16> to vector<64x128xbf16>
    %cst_112 = arith.constant dense<0.000000e+00> : vector<2x128xf32>
    %422 = tpu.matmul %419, %421, %cst_112 {dimension_numbers = #tpu.dot_dimension_numbers<[1], [0], [0], [1], [0, 0, 1, 1], [], []>} : vector<2x64xbf16>, vector<64x128xbf16>, vector<2x128xf32> -> vector<2x128xf32>
    %c0_113 = arith.constant 0 : index
    %c0_114 = arith.constant 0 : index
    %c0_115 = arith.constant 0 : index
    %423 = vector.load %arg9[%c0_113, %c0_114, %c0_115] : memref<1x1x128xf32, #tpu.memory_space<vmem>>, vector<1x1x128xf32>
    %424 = vector.shape_cast %423 : vector<1x1x128xf32> to vector<1x128xf32>
    %425 = vector.broadcast %424 : vector<1x128xf32> to vector<2x128xf32>
    %426 = arith.addf %422, %425 : vector<2x128xf32>
    %427 = vector.extract_strided_slice %426 {offsets = [0, 0], sizes = [2, 64], strides = [1, 1]} : vector<2x128xf32> to vector<2x64xf32>
    %428 = arith.negf %427 : vector<2x64xf32>
    %429 = math.exp %428 : vector<2x64xf32>
    %cst_116 = arith.constant 1.000000e+00 : f32
    %430 = vector.broadcast %cst_116 : f32 to vector<2x64xf32>
    %431 = arith.addf %430, %429 : vector<2x64xf32>
    %432 = arith.divf %430, %431 : vector<2x64xf32>
    %433 = vector.extract_strided_slice %432 {offsets = [0, 0], sizes = [2, 32], strides = [1, 1]} : vector<2x64xf32> to vector<2x32xf32>
    %434 = vector.extract_strided_slice %432 {offsets = [0, 32], sizes = [2, 32], strides = [1, 1]} : vector<2x64xf32> to vector<2x32xf32>
    %435 = vector.extract_strided_slice %426 {offsets = [0, 64], sizes = [2, 32], strides = [1, 1]} : vector<2x128xf32> to vector<2x32xf32>
    %436 = vector.extract_strided_slice %426 {offsets = [0, 96], sizes = [2, 32], strides = [1, 1]} : vector<2x128xf32> to vector<2x32xf32>
    %437 = arith.mulf %433, %436 : vector<2x32xf32>
    %438 = arith.addf %435, %437 : vector<2x32xf32>
    %439 = math.tanh %438 : vector<2x32xf32>
    %cst_117 = arith.constant 1.000000e+00 : f32
    %440 = vector.broadcast %cst_117 : f32 to vector<2x32xf32>
    %441 = arith.subf %440, %434 : vector<2x32xf32>
    %442 = arith.mulf %441, %439 : vector<2x32xf32>
    %443 = arith.mulf %434, %385 : vector<2x32xf32>
    %444 = arith.addf %442, %443 : vector<2x32xf32>
    %445 = vector.broadcast %35 : vector<1x32xf32> to vector<2x32xf32>
    %446 = arith.mulf %444, %445 : vector<2x32xf32>
    %cst_118 = arith.constant dense<0.000000e+00> : vector<2xf32>
    %447 = vector.multi_reduction <add>, %446, %cst_118 [1] : vector<2x32xf32> to vector<2xf32>
    %448 = vector.shape_cast %447 : vector<2xf32> to vector<2x1xf32>
    %449 = vector.broadcast %36 : vector<1x1xf32> to vector<2x1xf32>
    %450 = arith.addf %448, %449 : vector<2x1xf32>
    %451 = vector.broadcast %450 : vector<2x1xf32> to vector<2x128xf32>
    %452 = vector.broadcast %32 : vector<1x128xf32> to vector<2x128xf32>
    %453 = arith.mulf %451, %452 : vector<2x128xf32>
    %454 = vector.broadcast %33 : vector<1x128xf32> to vector<2x128xf32>
    %455 = arith.addf %453, %454 : vector<2x128xf32>
    %456 = arith.truncf %417 : vector<2x32xf32> to vector<2x32xbf16>
    %cst_119 = arith.constant dense<0.000000e+00> : vector<2x128xf32>
    %457 = tpu.matmul %456, %34, %cst_119 {dimension_numbers = #tpu.dot_dimension_numbers<[1], [0], [0], [1], [0, 0, 1, 1], [], []>} : vector<2x32xbf16>, vector<32x128xbf16>, vector<2x128xf32> -> vector<2x128xf32>
    %458 = arith.addf %455, %457 : vector<2x128xf32>
    %459 = vector.extract_strided_slice %458 {offsets = [0, 0], sizes = [2, 64], strides = [1, 1]} : vector<2x128xf32> to vector<2x64xf32>
    %460 = arith.negf %459 : vector<2x64xf32>
    %461 = math.exp %460 : vector<2x64xf32>
    %cst_120 = arith.constant 1.000000e+00 : f32
    %462 = vector.broadcast %cst_120 : f32 to vector<2x64xf32>
    %463 = arith.addf %462, %461 : vector<2x64xf32>
    %464 = arith.divf %462, %463 : vector<2x64xf32>
    %465 = vector.extract_strided_slice %464 {offsets = [0, 0], sizes = [2, 32], strides = [1, 1]} : vector<2x64xf32> to vector<2x32xf32>
    %466 = vector.extract_strided_slice %464 {offsets = [0, 32], sizes = [2, 32], strides = [1, 1]} : vector<2x64xf32> to vector<2x32xf32>
    %467 = vector.extract_strided_slice %458 {offsets = [0, 64], sizes = [2, 32], strides = [1, 1]} : vector<2x128xf32> to vector<2x32xf32>
    %468 = vector.extract_strided_slice %458 {offsets = [0, 96], sizes = [2, 32], strides = [1, 1]} : vector<2x128xf32> to vector<2x32xf32>
    %469 = arith.mulf %465, %468 : vector<2x32xf32>
    %470 = arith.addf %467, %469 : vector<2x32xf32>
    %471 = math.tanh %470 : vector<2x32xf32>
    %cst_121 = arith.constant 1.000000e+00 : f32
    %472 = vector.broadcast %cst_121 : f32 to vector<2x32xf32>
    %473 = arith.subf %472, %466 : vector<2x32xf32>
    %474 = arith.mulf %473, %471 : vector<2x32xf32>
    %475 = arith.mulf %466, %417 : vector<2x32xf32>
    %476 = arith.addf %474, %475 : vector<2x32xf32>
    %477 = tpu.concatenate %476, %444 in 1 : vector<2x32xf32>, vector<2x32xf32> -> vector<2x64xf32>
    %478 = arith.truncf %477 : vector<2x64xf32> to vector<2x64xbf16>
    %c0_122 = arith.constant 0 : index
    %c0_123 = arith.constant 0 : index
    %c0_124 = arith.constant 0 : index
    %479 = vector.load %arg8[%c0_122, %c0_123, %c0_124] : memref<1x64x128xbf16, #tpu.memory_space<vmem>>, vector<1x64x128xbf16>
    %480 = vector.shape_cast %479 : vector<1x64x128xbf16> to vector<64x128xbf16>
    %cst_125 = arith.constant dense<0.000000e+00> : vector<2x128xf32>
    %481 = tpu.matmul %478, %480, %cst_125 {dimension_numbers = #tpu.dot_dimension_numbers<[1], [0], [0], [1], [0, 0, 1, 1], [], []>} : vector<2x64xbf16>, vector<64x128xbf16>, vector<2x128xf32> -> vector<2x128xf32>
    %c0_126 = arith.constant 0 : index
    %c0_127 = arith.constant 0 : index
    %c0_128 = arith.constant 0 : index
    %482 = vector.load %arg9[%c0_126, %c0_127, %c0_128] : memref<1x1x128xf32, #tpu.memory_space<vmem>>, vector<1x1x128xf32>
    %483 = vector.shape_cast %482 : vector<1x1x128xf32> to vector<1x128xf32>
    %484 = vector.broadcast %483 : vector<1x128xf32> to vector<2x128xf32>
    %485 = arith.addf %481, %484 : vector<2x128xf32>
    %486 = vector.extract_strided_slice %485 {offsets = [0, 0], sizes = [2, 64], strides = [1, 1]} : vector<2x128xf32> to vector<2x64xf32>
    %487 = arith.negf %486 : vector<2x64xf32>
    %488 = math.exp %487 : vector<2x64xf32>
    %cst_129 = arith.constant 1.000000e+00 : f32
    %489 = vector.broadcast %cst_129 : f32 to vector<2x64xf32>
    %490 = arith.addf %489, %488 : vector<2x64xf32>
    %491 = arith.divf %489, %490 : vector<2x64xf32>
    %492 = vector.extract_strided_slice %491 {offsets = [0, 0], sizes = [2, 32], strides = [1, 1]} : vector<2x64xf32> to vector<2x32xf32>
    %493 = vector.extract_strided_slice %491 {offsets = [0, 32], sizes = [2, 32], strides = [1, 1]} : vector<2x64xf32> to vector<2x32xf32>
    %494 = vector.extract_strided_slice %485 {offsets = [0, 64], sizes = [2, 32], strides = [1, 1]} : vector<2x128xf32> to vector<2x32xf32>
    %495 = vector.extract_strided_slice %485 {offsets = [0, 96], sizes = [2, 32], strides = [1, 1]} : vector<2x128xf32> to vector<2x32xf32>
    %496 = arith.mulf %492, %495 : vector<2x32xf32>
    %497 = arith.addf %494, %496 : vector<2x32xf32>
    %498 = math.tanh %497 : vector<2x32xf32>
    %cst_130 = arith.constant 1.000000e+00 : f32
    %499 = vector.broadcast %cst_130 : f32 to vector<2x32xf32>
    %500 = arith.subf %499, %493 : vector<2x32xf32>
    %501 = arith.mulf %500, %498 : vector<2x32xf32>
    %502 = arith.mulf %493, %444 : vector<2x32xf32>
    %503 = arith.addf %501, %502 : vector<2x32xf32>
    %504 = vector.broadcast %35 : vector<1x32xf32> to vector<2x32xf32>
    %505 = arith.mulf %503, %504 : vector<2x32xf32>
    %cst_131 = arith.constant dense<0.000000e+00> : vector<2xf32>
    %506 = vector.multi_reduction <add>, %505, %cst_131 [1] : vector<2x32xf32> to vector<2xf32>
    %507 = vector.shape_cast %506 : vector<2xf32> to vector<2x1xf32>
    %508 = vector.broadcast %36 : vector<1x1xf32> to vector<2x1xf32>
    %509 = arith.addf %507, %508 : vector<2x1xf32>
    %510 = tpu.concatenate %96, %155, %214, %273, %332, %391, %450, %509 in 1 : vector<2x1xf32>, vector<2x1xf32>, vector<2x1xf32>, vector<2x1xf32>, vector<2x1xf32>, vector<2x1xf32>, vector<2x1xf32>, vector<2x1xf32> -> vector<2x8xf32>
    %c0_132 = arith.constant 0 : index
    %c0_133 = arith.constant 0 : index
    %511 = vector.load %arg12[%c0_132, %c0_133] : memref<2x8xf32, #tpu.memory_space<vmem>>, vector<2x8xf32>
    tpu.vector_store %arg12[%c0_132, %c0_133], %510 {strides = array<i32>} : memref<2x8xf32, #tpu.memory_space<vmem>>, vector<2x8xf32>,
    return
  }
  func.func @transform_0(%arg0: i32) -> (i32, i32, i32) {
    %c0_i32 = arith.constant 0 : i32
    %c0_i32_0 = arith.constant 0 : i32
    %c0_i32_1 = arith.constant 0 : i32
    %c0_i32_2 = arith.constant 0 : i32
    return %c0_i32, %c0_i32_0, %c0_i32_1 : i32, i32, i32
  }
  func.func @transform_1(%arg0: i32) -> (i32, i32, i32) {
    %c0_i32 = arith.constant 0 : i32
    %c0_i32_0 = arith.constant 0 : i32
    %c0_i32_1 = arith.constant 0 : i32
    %c0_i32_2 = arith.constant 0 : i32
    return %c0_i32, %c0_i32_0, %c0_i32_1 : i32, i32, i32
  }
  func.func @transform_2(%arg0: i32) -> (i32, i32) {
    %c0_i32 = arith.constant 0 : i32
    %c0_i32_0 = arith.constant 0 : i32
    %c0_i32_1 = arith.constant 0 : i32
    return %c0_i32, %c0_i32_0 : i32, i32
  }
  func.func @transform_3(%arg0: i32) -> (i32, i32) {
    %c0_i32 = arith.constant 0 : i32
    %c0_i32_0 = arith.constant 0 : i32
    %c0_i32_1 = arith.constant 0 : i32
    return %c0_i32, %c0_i32_0 : i32, i32
  }
  func.func @transform_4(%arg0: i32) -> (i32, i32) {
    %c0_i32 = arith.constant 0 : i32
    %c0_i32_0 = arith.constant 0 : i32
    %c0_i32_1 = arith.constant 0 : i32
    return %c0_i32, %c0_i32_0 : i32, i32
  }
  func.func @transform_5(%arg0: i32) -> (i32, i32) {
    %c0_i32 = arith.constant 0 : i32
    %c0_i32_0 = arith.constant 0 : i32
    %c0_i32_1 = arith.constant 0 : i32
    return %c0_i32, %c0_i32_0 : i32, i32
  }
  func.func @transform_6(%arg0: i32) -> (i32, i32) {
    %c0_i32 = arith.constant 0 : i32
    %c0_i32_0 = arith.constant 0 : i32
    %c0_i32_1 = arith.constant 0 : i32
    return %c0_i32, %c0_i32_0 : i32, i32
  }
  func.func @transform_7(%arg0: i32) -> (i32, i32, i32) {
    %c0_i32 = arith.constant 0 : i32
    %c0_i32_0 = arith.constant 0 : i32
    %c0_i32_1 = arith.constant 0 : i32
    %c0_i32_2 = arith.constant 0 : i32
    return %c0_i32, %c0_i32_0, %c0_i32_1 : i32, i32, i32
  }
  func.func @transform_8(%arg0: i32) -> (i32, i32, i32) {
    %c0_i32 = arith.constant 0 : i32
    %c0_i32_0 = arith.constant 0 : i32
    %c0_i32_1 = arith.constant 0 : i32
    %c0_i32_2 = arith.constant 0 : i32
    return %c0_i32, %c0_i32_0, %c0_i32_1 : i32, i32, i32
  }
  func.func @transform_9(%arg0: i32) -> (i32, i32) {
    %c0_i32 = arith.constant 0 : i32
    %c0_i32_0 = arith.constant 0 : i32
    %c0_i32_1 = arith.constant 0 : i32
    return %c0_i32, %c0_i32_0 : i32, i32
  }
  func.func @transform_10(%arg0: i32) -> (i32, i32) {
    %c0_i32 = arith.constant 0 : i32
    %c0_i32_0 = arith.constant 0 : i32
    %c0_i32_1 = arith.constant 0 : i32
    return %c0_i32, %c0_i32_0 : i32, i32
  }
  func.func @transform_11(%arg0: i32) -> (i32, i32) {
    %c0_i32 = arith.constant 0 : i32
    %c0_i32_0 = arith.constant 0 : i32
    %c0_i32_1 = arith.constant 0 : i32
    return %c0_i32, %c0_i32_0 : i32, i32
  }
}

</mosaic_0001>

<llo_original>
// kernel: tpu_custom_call.1
$region0: #{tpu_custom_call.1}
  #allocation0 [shape = 'u32[]', space=smem, size = 0x4, offset = 0x4, fixed_abs, tag = 'smem constant byte address 0x4 - core index']
  #allocation1 [shape = 'u32[144,128]{1,0:T(1,128)}', space=vmem, size = 0x12000, scoped, tag = 'internal scratch']
  #allocation2 [shape = 'f32[1,1]{1,0:T(1,128)S(1)}', space=vmem, size = 0x200, scoped, tag = 'scoped memory for tpu_custom_call.1']
  %s0 = inlined_call_operand.vmem [shape: f32[2,2,48], index: 0, kind: input, shape index: {}]
  %s1 = inlined_call_operand.vmem [shape: f32[2,2,48], index: 1, kind: input, shape index: {}]
  %s2 = inlined_call_operand.vmem [shape: bf16[48,32], index: 2, kind: input, shape index: {}]
  %s3 = inlined_call_operand.vmem [shape: f32[1,32], index: 3, kind: input, shape index: {}]
  %s4 = inlined_call_operand.vmem [shape: f32[1,128], index: 4, kind: input, shape index: {}]
  %s5 = inlined_call_operand.vmem [shape: f32[1,128], index: 5, kind: input, shape index: {}]
  %s6 = inlined_call_operand.vmem [shape: bf16[32,128], index: 6, kind: input, shape index: {}]
  %s7 = inlined_call_operand.vmem [shape: bf16[1,64,128], index: 7, kind: input, shape index: {}]
  %s8 = inlined_call_operand.vmem [shape: f32[1,1,128], index: 8, kind: input, shape index: {}]
  %s9 = inlined_call_operand.vmem [shape: f32[1,32], index: 9, kind: input, shape index: {}]
  %s10 = inlined_call_operand.<no memory space> [shape: f32[1,1], index: 10, kind: input, shape index: {}]
  %s11 = inlined_call_operand.hbm [shape: f32[2,8], index: 11, kind: output, shape index: {}]
  %s12 = sld [smem:[#allocation0]]
  $region54: #{tpu_custom_call.1} parent=0
    _
  %s14 = ssub.s32 1, %s12
  %s15 = scalar_select 0, %s14, %s12
  %v16 = vstv %s10
  %17 = vst [vmem:[#allocation2] sm:$0x1] %v16
  $region1: #{tpu_custom_call.1} parent=0
    #allocation3 [shape = 'u8[1024]{0}', space=vmem, size = 0x400, scoped, tag = 'output window, operand 0, single buffered']
    #allocation4 [shape = 's32[1]{0}', space=sflag, size = 0x4, scoped, tag = 'scoped memory for tpu_custom_call.1']
    %18 = vsyncpa [#allocation4], 0
    // Predicated region
    $region2: #{tpu_custom_call.1} parent=1 // pred_check
      _
    $region3: #{tpu_custom_call.1} parent=1 // pred_check_branch
      %20 = sbr.rel (0) target = $region5
    $region4: #{tpu_custom_call.1} parent=1 // pred_region
      _
    $region5: #{tpu_custom_call.1} parent=1 // pred_fallthru
      _
    // Predicated region
    $region6: #{tpu_custom_call.1} parent=1 // pred_check
      _
    $region7: #{tpu_custom_call.1} parent=1 // pred_check_branch
      %22 = sbr.rel (0) target = $region9
    $region8: #{tpu_custom_call.1} parent=1 // pred_region
      _
    $region9: #{tpu_custom_call.1} parent=1 // pred_fallthru
      _
    // Predicated region
    $region10: #{tpu_custom_call.1} parent=1 // pred_check
      _
    $region11: #{tpu_custom_call.1} parent=1 // pred_check_branch
      %24 = sbr.rel (0) target = $region13
    $region12: #{tpu_custom_call.1} parent=1 // pred_region
      _
    $region13: #{tpu_custom_call.1} parent=1 // pred_fallthru
      _
    // Predicated region
    $region14: #{tpu_custom_call.1} parent=1 // pred_check
      _
    $region15: #{tpu_custom_call.1} parent=1 // pred_check_branch
      %26 = sbr.rel (0) target = $region17
    $region16: #{tpu_custom_call.1} parent=1 // pred_region
      _
    $region17: #{tpu_custom_call.1} parent=1 // pred_fallthru
      _
    // Predicated region
    $region18: #{tpu_custom_call.1} parent=1 // pred_check
      _
    $region19: #{tpu_custom_call.1} parent=1 // pred_check_branch
      %28 = sbr.rel (0) target = $region21
    $region20: #{tpu_custom_call.1} parent=1 // pred_region
      _
    $region21: #{tpu_custom_call.1} parent=1 // pred_fallthru
      _
    // Predicated region
    $region22: #{tpu_custom_call.1} parent=1 // pred_check
      _
    $region23: #{tpu_custom_call.1} parent=1 // pred_check_branch
      %30 = sbr.rel (0) target = $region25
    $region24: #{tpu_custom_call.1} parent=1 // pred_region
      _
    $region25: #{tpu_custom_call.1} parent=1 // pred_fallthru
      _
    // Predicated region
    $region26: #{tpu_custom_call.1} parent=1 // pred_check
      _
    $region27: #{tpu_custom_call.1} parent=1 // pred_check_branch
      %32 = sbr.rel (0) target = $region29
    $region28: #{tpu_custom_call.1} parent=1 // pred_region
      _
    $region29: #{tpu_custom_call.1} parent=1 // pred_fallthru
      _
    // Predicated region
    $region30: #{tpu_custom_call.1} parent=1 // pred_check
      _
    $region31: #{tpu_custom_call.1} parent=1 // pred_check_branch
      %34 = sbr.rel (0) target = $region33
    $region32: #{tpu_custom_call.1} parent=1 // pred_region
      _
    $region33: #{tpu_custom_call.1} parent=1 // pred_fallthru
      _
    // Predicated region
    $region34: #{tpu_custom_call.1} parent=1 // pred_check
      _
    $region35: #{tpu_custom_call.1} parent=1 // pred_check_branch
      %36 = sbr.rel (0) target = $region37
    $region36: #{tpu_custom_call.1} parent=1 // pred_region
      _
    $region37: #{tpu_custom_call.1} parent=1 // pred_fallthru
      _
    // Predicated region
    $region38: #{tpu_custom_call.1} parent=1 // pred_check
      _
    $region39: #{tpu_custom_call.1} parent=1 // pred_check_branch
      %38 = sbr.rel (0) target = $region41
    $region40: #{tpu_custom_call.1} parent=1 // pred_region
      _
    $region41: #{tpu_custom_call.1} parent=1 // pred_fallthru
      _
    // Predicated region
    $region42: #{tpu_custom_call.1} parent=1 // pred_check
      _
    $region43: #{tpu_custom_call.1} parent=1 // pred_check_branch
      %40 = sbr.rel (0) target = $region45
    $region44: #{tpu_custom_call.1} parent=1 // pred_region
      _
    $region45: #{tpu_custom_call.1} parent=1 // pred_fallthru
      _
    %v42 = vld [vmem:[%s2] sm:$0xf]
    %v43 = vld [vmem:[%s2 + $0x4] sm:$0xf]
    %v44 = vld [vmem:[%s2 + $0x8] sm:$0xf]
    %v45 = vld [vmem:[%s2 + $0xc] sm:$0xf]
    %v46 = vld [vmem:[%s2 + $0x10] sm:$0xf]
    %v47 = vld [vmem:[%s2 + $0x14] sm:$0xf]
    %v48 = vld [vmem:[%s3] sm:$0x1]
    %v49 = vld [vmem:[%s0] sm:$0x3]
    %v50 = vpack.c.bf16 %v49, %v49
    %v52 = vlaneseq
    %v53 = vshrl.u32 %v52, 7
    %v54 = vsub.s32 0, %v53
    %v55 = vrot.slane %v48, %v54
    %v63 = vunpack.c.l.b16 %v42
    %v64 = vunpack.c.l.b16 %v43
    %v65 = vunpack.c.l.b16 %v44
    %v66 = vunpack.c.l.b16 %v45
    %v67 = vunpack.c.l.b16 %v46
    %v68 = vunpack.c.l.b16 %v47
    %v69 = vpack.c.b16 %v64, %v63
    %v70 = vpack.c.b16 %v66, %v65
    %v71 = vpack.c.b16 %v68, %v67
    %vm75 = vcmask 392192
    %v77 = vsel %vm75, %v50, 0
    %79 = vmatprep.subr.bf16.mxu0 0
    %80 = vmatpush1.bf16.msra.mxu0 %v69
    %81 = vmatprep.subr.bf16.mxu0 0
    %82 = vmatpush1.bf16.msra.mxu0 %v70
    %83 = vmatprep.subr.bf16.mxu0 0
    %84 = vmatpush1.bf16.msra.mxu0 %v71
    %85 = vmatprep.subr.bf16.mxu0 0
    %86 = vmatpush1.bf16.msra.mxu0 0
    %87 = vmatprep.subr.bf16.mxu0 0
    %88 = vmatpush1.bf16.msra.mxu0 0
    %89 = vmatprep.subr.bf16.mxu0 0
    %90 = vmatpush1.bf16.msra.mxu0 0
    %91 = vmatprep.subr.bf16.mxu0 0
    %92 = vmatpush1.bf16.msra.mxu0 0
    %93 = vmatprep.subr.bf16.mxu0 0
    %94 = vmatpush1.bf16.msra.mxu0 0
    %95 = vmatprep.subr.bf16.mxu0 0
    %96 = vmatpush1.bf16.msra.mxu0 0
    %97 = vmatprep.subr.bf16.mxu0 0
    %98 = vmatpush1.bf16.msra.mxu0 0
    %99 = vmatprep.subr.bf16.mxu0 0
    %100 = vmatpush1.bf16.msra.mxu0 0
    %101 = vmatprep.subr.bf16.mxu0 0
    %102 = vmatpush1.bf16.msra.mxu0 0
    %103 = vmatprep.subr.bf16.mxu0 0
    %104 = vmatpush1.bf16.msra.mxu0 0
    %105 = vmatprep.subr.bf16.mxu0 0
    %106 = vmatpush1.bf16.msra.mxu0 0
    %107 = vmatprep.subr.bf16.mxu0 0
    %108 = vmatpush1.bf16.msra.mxu0 0
    %109 = vmatprep.subr.bf16.mxu0 0
    %110 = vmatpush1.bf16.msra.mxu0 0
    %111 = vmatprep.mubr.bf16.mxu0 0
    %112 = vmatmul.mubr.bf16.gmra.mrb[0].mxu0 %v77
    %v113 = vpop.f32.mrb[0].mxu0
    %v114 = vadd.f32 %v55, %v113
    %v115 = vpop.f32.mrb[0].mxu0
    %v116 = vpop.f32.mrb[0].mxu0
    %v117 = vpop.f32.mrb[0].mxu0
    %118 = vdwg.mxu0
    %v119 = vtanh.pop %v114
    %v120 = vld [vmem:[%s1] sm:$0x3]
    %v121 = vpack.c.bf16 %v120, %v120
    %v123 = vsel %vm75, %v121, 0
    %125 = vmatprep.subr.bf16.mxu0 0
    %126 = vmatpush1.bf16.msra.mxu0 %v69
    %127 = vmatprep.subr.bf16.mxu0 0
    %128 = vmatpush1.bf16.msra.mxu0 %v70
    %129 = vmatprep.subr.bf16.mxu0 0
    %130 = vmatpush1.bf16.msra.mxu0 %v71
    %131 = vmatprep.subr.bf16.mxu0 0
    %132 = vmatpush1.bf16.msra.mxu0 0
    %133 = vmatprep.subr.bf16.mxu0 0
    %134 = vmatpush1.bf16.msra.mxu0 0
    %135 = vmatprep.subr.bf16.mxu0 0
    %136 = vmatpush1.bf16.msra.mxu0 0
    %137 = vmatprep.subr.bf16.mxu0 0
    %138 = vmatpush1.bf16.msra.mxu0 0
    %139 = vmatprep.subr.bf16.mxu0 0
    %140 = vmatpush1.bf16.msra.mxu0 0
    %141 = vmatprep.subr.bf16.mxu0 0
    %142 = vmatpush1.bf16.msra.mxu0 0
    %143 = vmatprep.subr.bf16.mxu0 0
    %144 = vmatpush1.bf16.msra.mxu0 0
    %145 = vmatprep.subr.bf16.mxu0 0
    %146 = vmatpush1.bf16.msra.mxu0 0
    %147 = vmatprep.subr.bf16.mxu0 0
    %148 = vmatpush1.bf16.msra.mxu0 0
    %149 = vmatprep.subr.bf16.mxu0 0
    %150 = vmatpush1.bf16.msra.mxu0 0
    %151 = vmatprep.subr.bf16.mxu0 0
    %152 = vmatpush1.bf16.msra.mxu0 0
    %153 = vmatprep.subr.bf16.mxu0 0
    %154 = vmatpush1.bf16.msra.mxu0 0
    %155 = vmatprep.subr.bf16.mxu0 0
    %156 = vmatpush1.bf16.msra.mxu0 0
    %157 = vmatprep.mubr.bf16.mxu0 0
    %158 = vmatmul.mubr.bf16.gmra.mrb[0].mxu0 %v123
    %v159 = vpop.f32.mrb[0].mxu0
    %v160 = vadd.f32 %v55, %v159
    %v161 = vpop.f32.mrb[0].mxu0
    %v162 = vpop.f32.mrb[0].mxu0
    %v163 = vpop.f32.mrb[0].mxu0
    %164 = vdwg.mxu0
    %v165 = vtanh.pop %v160
    %v166 = vsub.f32 %v165, %v119
    %s167 = scalar_lea.vmem %s0, 2
    %v168 = vld [vmem:[%s167] sm:$0x3]
    %v169 = vpack.c.bf16 %v168, %v168
    %v171 = vsel %vm75, %v169, 0
    %173 = vmatprep.subr.bf16.mxu0 0
    %174 = vmatpush1.bf16.msra.mxu0 %v69
    %175 = vmatprep.subr.bf16.mxu0 0
    %176 = vmatpush1.bf16.msra.mxu0 %v70
    %177 = vmatprep.subr.bf16.mxu0 0
    %178 = vmatpush1.bf16.msra.mxu0 %v71
    %179 = vmatprep.subr.bf16.mxu0 0
    %180 = vmatpush1.bf16.msra.mxu0 0
    %181 = vmatprep.subr.bf16.mxu0 0
    %182 = vmatpush1.bf16.msra.mxu0 0
    %183 = vmatprep.subr.bf16.mxu0 0
    %184 = vmatpush1.bf16.msra.mxu0 0
    %185 = vmatprep.subr.bf16.mxu0 0
    %186 = vmatpush1.bf16.msra.mxu0 0
    %187 = vmatprep.subr.bf16.mxu0 0
    %188 = vmatpush1.bf16.msra.mxu0 0
    %189 = vmatprep.subr.bf16.mxu0 0
    %190 = vmatpush1.bf16.msra.mxu0 0
    %191 = vmatprep.subr.bf16.mxu0 0
    %192 = vmatpush1.bf16.msra.mxu0 0
    %193 = vmatprep.subr.bf16.mxu0 0
    %194 = vmatpush1.bf16.msra.mxu0 0
    %195 = vmatprep.subr.bf16.mxu0 0
    %196 = vmatpush1.bf16.msra.mxu0 0
    %197 = vmatprep.subr.bf16.mxu0 0
    %198 = vmatpush1.bf16.msra.mxu0 0
    %199 = vmatprep.subr.bf16.mxu0 0
    %200 = vmatpush1.bf16.msra.mxu0 0
    %201 = vmatprep.subr.bf16.mxu0 0
    %202 = vmatpush1.bf16.msra.mxu0 0
    %203 = vmatprep.subr.bf16.mxu0 0
    %204 = vmatpush1.bf16.msra.mxu0 0
    %205 = vmatprep.mubr.bf16.mxu0 0
    %206 = vmatmul.mubr.bf16.gmra.mrb[0].mxu0 %v171
    %v207 = vpop.f32.mrb[0].mxu0
    %v208 = vadd.f32 %v55, %v207
    %v209 = vpop.f32.mrb[0].mxu0
    %v210 = vpop.f32.mrb[0].mxu0
    %v211 = vpop.f32.mrb[0].mxu0
    %212 = vdwg.mxu0
    %v213 = vtanh.pop %v208
    %s214 = scalar_lea.vmem %s1, 2
    %v215 = vld [vmem:[%s214] sm:$0x3]
    %v216 = vpack.c.bf16 %v215, %v215
    %v218 = vsel %vm75, %v216, 0
    %220 = vmatprep.subr.bf16.mxu0 0
    %221 = vmatpush1.bf16.msra.mxu0 %v69
    %222 = vmatprep.subr.bf16.mxu0 0
    %223 = vmatpush1.bf16.msra.mxu0 %v70
    %224 = vmatprep.subr.bf16.mxu0 0
    %225 = vmatpush1.bf16.msra.mxu0 %v71
    %226 = vmatprep.subr.bf16.mxu0 0
    %227 = vmatpush1.bf16.msra.mxu0 0
    %228 = vmatprep.subr.bf16.mxu0 0
    %229 = vmatpush1.bf16.msra.mxu0 0
    %230 = vmatprep.subr.bf16.mxu0 0
    %231 = vmatpush1.bf16.msra.mxu0 0
    %232 = vmatprep.subr.bf16.mxu0 0
    %233 = vmatpush1.bf16.msra.mxu0 0
    %234 = vmatprep.subr.bf16.mxu0 0
    %235 = vmatpush1.bf16.msra.mxu0 0
    %236 = vmatprep.subr.bf16.mxu0 0
    %237 = vmatpush1.bf16.msra.mxu0 0
    %238 = vmatprep.subr.bf16.mxu0 0
    %239 = vmatpush1.bf16.msra.mxu0 0
    %240 = vmatprep.subr.bf16.mxu0 0
    %241 = vmatpush1.bf16.msra.mxu0 0
    %242 = vmatprep.subr.bf16.mxu0 0
    %243 = vmatpush1.bf16.msra.mxu0 0
    %244 = vmatprep.subr.bf16.mxu0 0
    %245 = vmatpush1.bf16.msra.mxu0 0
    %246 = vmatprep.subr.bf16.mxu0 0
    %247 = vmatpush1.bf16.msra.mxu0 0
    %248 = vmatprep.subr.bf16.mxu0 0
    %249 = vmatpush1.bf16.msra.mxu0 0
    %250 = vmatprep.subr.bf16.mxu0 0
    %251 = vmatpush1.bf16.msra.mxu0 0
    %252 = vmatprep.mubr.bf16.mxu0 0
    %253 = vmatmul.mubr.bf16.gmra.mrb[0].mxu0 %v218
    %v254 = vpop.f32.mrb[0].mxu0
    %v255 = vadd.f32 %v55, %v254
    %v256 = vpop.f32.mrb[0].mxu0
    %v257 = vpop.f32.mrb[0].mxu0
    %v258 = vpop.f32.mrb[0].mxu0
    %259 = vdwg.mxu0
    %v260 = vtanh.pop %v255
    %v261 = vsub.f32 %v260, %v213
    %v262 = vld [vmem:[%s4] sm:$0x1]
    %v263 = vld [vmem:[%s5] sm:$0x1]
    %v264 = vld [vmem:[%s6] sm:$0xf]
    %v265 = vld [vmem:[%s6 + $0x4] sm:$0xf]
    %v266 = vld [vmem:[%s6 + $0x8] sm:$0xf]
    %v267 = vld [vmem:[%s6 + $0xc] sm:$0xf]
    %v268 = vld [vmem:[%s9] sm:$0x1]
    %v269 = vld [vmem:[#allocation2] sm:$0x1]
    %v271 = vlaneseq
    %v272 = vshrl.u32 %v271, 7
    %v273 = vsub.s32 0, %v272
    %v274 = vrot.slane %v262, %v273
    %v276 = vmul.f32 %v274, 0.0
    %v278 = vlaneseq
    %v279 = vshrl.u32 %v278, 7
    %v280 = vsub.s32 0, %v279
    %v281 = vrot.slane %v263, %v280
    %v283 = vadd.f32 %v276, %v281
    %v284 = vpack.c.bf16 %v166, %v166
    %v289 = vunpack.c.l.b16 %v264
    %v290 = vunpack.c.l.b16 %v265
    %v291 = vunpack.c.l.b16 %v266
    %v292 = vunpack.c.l.b16 %v267
    %v293 = vpack.c.b16 %v290, %v289
    %v294 = vpack.c.b16 %v292, %v291
    %vm297 = vcmask 261120
    %v299 = vsel %vm297, %v284, 0
    %301 = vmatprep.subr.bf16.mxu0 0
    %302 = vmatpush1.bf16.msra.mxu0 %v293
    %303 = vmatprep.subr.bf16.mxu0 0
    %304 = vmatpush1.bf16.msra.mxu0 %v294
    %305 = vmatprep.subr.bf16.mxu0 0
    %306 = vmatpush1.bf16.msra.mxu0 0
    %307 = vmatprep.subr.bf16.mxu0 0
    %308 = vmatpush1.bf16.msra.mxu0 0
    %309 = vmatprep.subr.bf16.mxu0 0
    %310 = vmatpush1.bf16.msra.mxu0 0
    %311 = vmatprep.subr.bf16.mxu0 0
    %312 = vmatpush1.bf16.msra.mxu0 0
    %313 = vmatprep.subr.bf16.mxu0 0
    %314 = vmatpush1.bf16.msra.mxu0 0
    %315 = vmatprep.subr.bf16.mxu0 0
    %316 = vmatpush1.bf16.msra.mxu0 0
    %317 = vmatprep.subr.bf16.mxu0 0
    %318 = vmatpush1.bf16.msra.mxu0 0
    %319 = vmatprep.subr.bf16.mxu0 0
    %320 = vmatpush1.bf16.msra.mxu0 0
    %321 = vmatprep.subr.bf16.mxu0 0
    %322 = vmatpush1.bf16.msra.mxu0 0
    %323 = vmatprep.subr.bf16.mxu0 0
    %324 = vmatpush1.bf16.msra.mxu0 0
    %325 = vmatprep.subr.bf16.mxu0 0
    %326 = vmatpush1.bf16.msra.mxu0 0
    %327 = vmatprep.subr.bf16.mxu0 0
    %328 = vmatpush1.bf16.msra.mxu0 0
    %329 = vmatprep.subr.bf16.mxu0 0
    %330 = vmatpush1.bf16.msra.mxu0 0
    %331 = vmatprep.subr.bf16.mxu0 0
    %332 = vmatpush1.bf16.msra.mxu0 0
    %333 = vmatprep.mubr.bf16.mxu0 0
    %334 = vmatmul.mubr.bf16.gmra.mrb[0].mxu0 %v299
    %v335 = vpop.f32.mrb[0].mxu0
    %v336 = vadd.f32 0.0, %v335
    %v337 = vpop.f32.mrb[0].mxu0
    %v338 = vpop.f32.mrb[0].mxu0
    %v339 = vpop.f32.mrb[0].mxu0
    %340 = vdwg.mxu0
    %v341 = vadd.f32 %v283, %v336
    %v342 = vxor.u32 %v341, 2147483648
    %v343 = vmul.f32 %v342, 1.442695
    %v344 = vpow.pop %v343
    %v345 = vadd.f32 %v344, 1.0
    %v346 = vrcp.pop %v345
    %v347 = vmul.f32 1.0, %v346
    %349 = vrot.lane.b32.xlu0 %v341, 32
    %v350 = vpop.permute.xlu0 %349
    %v352 = vmul.f32 %v347, %v350
    %354 = vrot.lane.b32.xlu0 %v352, 64
    %v355 = vpop.permute.xlu0 %354
    %v357 = vadd.f32 %v341, %v355
    %v358 = vtanh.pop %v357
    %v359 = vsub.f32 1.0, %v347
    %361 = vrot.lane.b32.xlu0 %v358, 96
    %v362 = vpop.permute.xlu0 %361
    %v364 = vmul.f32 %v359, %v362
    %366 = vrot.lane.b32.xlu0 %v166, 32
    %v367 = vpop.permute.xlu0 %366
    %v369 = vmul.f32 %v347, %v367
    %v370 = vadd.f32 %v364, %v369
    %372 = vrot.lane.b32.xlu0 %v370, 96
    %v373 = vpop.permute.xlu0 %372
    %376 = vrot.lane.b32.xlu0 %v261, 32
    %v377 = vpop.permute.xlu0 %376
    %v379 = vsel %vm297, %v373, %v377
    %v380 = vpack.c.bf16 %v379, %v379
    %v381 = vld [vmem:[%s7] sm:$0xf]
    %v382 = vld [vmem:[%s7 + $0x4] sm:$0xf]
    %v383 = vld [vmem:[%s7 + $0x8] sm:$0xf]
    %v384 = vld [vmem:[%s7 + $0xc] sm:$0xf]
    %v385 = vld [vmem:[%s7 + $0x10] sm:$0xf]
    %v386 = vld [vmem:[%s7 + $0x14] sm:$0xf]
    %v387 = vld [vmem:[%s7 + $0x18] sm:$0xf]
    %v388 = vld [vmem:[%s7 + $0x1c] sm:$0xf]
    %v389 = vld [vmem:[%s8] sm:$0x1]
    %v391 = vlaneseq
    %v392 = vshrl.u32 %v391, 7
    %v393 = vsub.s32 0, %v392
    %v394 = vrot.slane %v389, %v393
    %v404 = vunpack.c.l.b16 %v381
    %v405 = vunpack.c.l.b16 %v382
    %v406 = vunpack.c.l.b16 %v383
    %v407 = vunpack.c.l.b16 %v384
    %v408 = vunpack.c.l.b16 %v385
    %v409 = vunpack.c.l.b16 %v386
    %v410 = vunpack.c.l.b16 %v387
    %v411 = vunpack.c.l.b16 %v388
    %v412 = vpack.c.b16 %v405, %v404
    %v413 = vpack.c.b16 %v407, %v406
    %v414 = vpack.c.b16 %v409, %v408
    %v415 = vpack.c.b16 %v411, %v410
    %vm420 = vcmask 523264
    %v422 = vsel %vm420, %v380, 0
    %424 = vmatprep.subr.bf16.mxu0 0
    %425 = vmatpush1.bf16.msra.mxu0 %v412
    %426 = vmatprep.subr.bf16.mxu0 0
    %427 = vmatpush1.bf16.msra.mxu0 %v413
    %428 = vmatprep.subr.bf16.mxu0 0
    %429 = vmatpush1.bf16.msra.mxu0 %v414
    %430 = vmatprep.subr.bf16.mxu0 0
    %431 = vmatpush1.bf16.msra.mxu0 %v415
    %432 = vmatprep.subr.bf16.mxu0 0
    %433 = vmatpush1.bf16.msra.mxu0 0
    %434 = vmatprep.subr.bf16.mxu0 0
    %435 = vmatpush1.bf16.msra.mxu0 0
    %436 = vmatprep.subr.bf16.mxu0 0
    %437 = vmatpush1.bf16.msra.mxu0 0
    %438 = vmatprep.subr.bf16.mxu0 0
    %439 = vmatpush1.bf16.msra.mxu0 0
    %440 = vmatprep.subr.bf16.mxu0 0
    %441 = vmatpush1.bf16.msra.mxu0 0
    %442 = vmatprep.subr.bf16.mxu0 0
    %443 = vmatpush1.bf16.msra.mxu0 0
    %444 = vmatprep.subr.bf16.mxu0 0
    %445 = vmatpush1.bf16.msra.mxu0 0
    %446 = vmatprep.subr.bf16.mxu0 0
    %447 = vmatpush1.bf16.msra.mxu0 0
    %448 = vmatprep.subr.bf16.mxu0 0
    %449 = vmatpush1.bf16.msra.mxu0 0
    %450 = vmatprep.subr.bf16.mxu0 0
    %451 = vmatpush1.bf16.msra.mxu0 0
    %452 = vmatprep.subr.bf16.mxu0 0
    %453 = vmatpush1.bf16.msra.mxu0 0
    %454 = vmatprep.subr.bf16.mxu0 0
    %455 = vmatpush1.bf16.msra.mxu0 0
    %456 = vmatprep.mubr.bf16.mxu0 0
    %457 = vmatmul.mubr.bf16.gmra.mrb[0].mxu0 %v422
    %v458 = vpop.f32.mrb[0].mxu0
    %v459 = vadd.f32 %v394, %v458
    %v460 = vpop.f32.mrb[0].mxu0
    %v461 = vpop.f32.mrb[0].mxu0
    %v462 = vpop.f32.mrb[0].mxu0
    %463 = vdwg.mxu0
    %v464 = vxor.u32 %v459, 2147483648
    %v465 = vmul.f32 %v464, 1.442695
    %v466 = vpow.pop %v465
    %v467 = vadd.f32 %v466, 1.0
    %v468 = vrcp.pop %v467
    %v469 = vmul.f32 1.0, %v468
    %471 = vrot.lane.b32.xlu0 %v459, 32
    %v472 = vpop.permute.xlu0 %471
    %v474 = vmul.f32 %v469, %v472
    %476 = vrot.lane.b32.xlu0 %v474, 64
    %v477 = vpop.permute.xlu0 %476
    %v479 = vadd.f32 %v459, %v477
    %v480 = vtanh.pop %v479
    %v481 = vsub.f32 1.0, %v469
    %483 = vrot.lane.b32.xlu0 %v480, 96
    %v484 = vpop.permute.xlu0 %483
    %v486 = vmul.f32 %v481, %v484
    %v487 = vmul.f32 %v469, %v377
    %v488 = vadd.f32 %v486, %v487
    %v490 = vlaneseq
    %v491 = vshrl.u32 %v490, 7
    %v492 = vsub.s32 0, %v491
    %v493 = vrot.slane %v268, %v492
    %494 = vrot.lane.b32.xlu0 %v493, 32
    %v495 = vpop.permute.xlu0 %494
    %v497 = vmul.f32 %v488, %v495
    %499 = vrot.lane.b32.xlu0 %v497, 96
    %v500 = vpop.permute.xlu0 %499
    %vm502 = vcmask 254976
    %v503 = vsel %vm502, %v500, 0.0
    %504 = vadd.xlane.f32.xlu0 %v503
    %v505 = vpop.xlane.xlu0 %504
    %v507 = vlaneseq
    %v508 = vshrl.u32 %v507, 7
    %v509 = vsub.s32 0, %v508
    %v510 = vrot.slane %v269, %v509
    %v512 = vadd.f32 %v505, %v510
    %514 = vset.pattern.permute.xlu0 0
    %515 = vperm.xlu0 %514, %v512
    %v516 = vpop.permute.xlu0 %515
    %v518 = vmul.f32 %v516, %v274
    %v519 = vadd.f32 %v518, %v281
    %v520 = vpack.c.bf16 %v370, %v370
    %522 = vrot.lane.b32.xlu0 %v520, 96
    %v523 = vpop.permute.xlu0 %522
    %v525 = vsel %vm297, %v523, 0
    %527 = vmatprep.subr.bf16.mxu0 0
    %528 = vmatpush1.bf16.msra.mxu0 %v293
    %529 = vmatprep.subr.bf16.mxu0 0
    %530 = vmatpush1.bf16.msra.mxu0 %v294
    %531 = vmatprep.subr.bf16.mxu0 0
    %532 = vmatpush1.bf16.msra.mxu0 0
    %533 = vmatprep.subr.bf16.mxu0 0
    %534 = vmatpush1.bf16.msra.mxu0 0
    %535 = vmatprep.subr.bf16.mxu0 0
    %536 = vmatpush1.bf16.msra.mxu0 0
    %537 = vmatprep.subr.bf16.mxu0 0
    %538 = vmatpush1.bf16.msra.mxu0 0
    %539 = vmatprep.subr.bf16.mxu0 0
    %540 = vmatpush1.bf16.msra.mxu0 0
    %541 = vmatprep.subr.bf16.mxu0 0
    %542 = vmatpush1.bf16.msra.mxu0 0
    %543 = vmatprep.subr.bf16.mxu0 0
    %544 = vmatpush1.bf16.msra.mxu0 0
    %545 = vmatprep.subr.bf16.mxu0 0
    %546 = vmatpush1.bf16.msra.mxu0 0
    %547 = vmatprep.subr.bf16.mxu0 0
    %548 = vmatpush1.bf16.msra.mxu0 0
    %549 = vmatprep.subr.bf16.mxu0 0
    %550 = vmatpush1.bf16.msra.mxu0 0
    %551 = vmatprep.subr.bf16.mxu0 0
    %552 = vmatpush1.bf16.msra.mxu0 0
    %553 = vmatprep.subr.bf16.mxu0 0
    %554 = vmatpush1.bf16.msra.mxu0 0
    %555 = vmatprep.subr.bf16.mxu0 0
    %556 = vmatpush1.bf16.msra.mxu0 0
    %557 = vmatprep.subr.bf16.mxu0 0
    %558 = vmatpush1.bf16.msra.mxu0 0
    %559 = vmatprep.mubr.bf16.mxu0 0
    %560 = vmatmul.mubr.bf16.gmra.mrb[0].mxu0 %v525
    %v561 = vpop.f32.mrb[0].mxu0
    %v562 = vadd.f32 0.0, %v561
    %v563 = vpop.f32.mrb[0].mxu0
    %v564 = vpop.f32.mrb[0].mxu0
    %v565 = vpop.f32.mrb[0].mxu0
    %566 = vdwg.mxu0
    %v567 = vadd.f32 %v519, %v562
    %v568 = vxor.u32 %v567, 2147483648
    %v569 = vmul.f32 %v568, 1.442695
    %v570 = vpow.pop %v569
    %v571 = vadd.f32 %v570, 1.0
    %v572 = vrcp.pop %v571
    %v573 = vmul.f32 1.0, %v572
    %575 = vrot.lane.b32.xlu0 %v567, 32
    %v576 = vpop.permute.xlu0 %575
    %v578 = vmul.f32 %v573, %v576
    %580 = vrot.lane.b32.xlu0 %v578, 64
    %v581 = vpop.permute.xlu0 %580
    %v583 = vadd.f32 %v567, %v581
    %v584 = vtanh.pop %v583
    %v585 = vsub.f32 1.0, %v573
    %587 = vrot.lane.b32.xlu0 %v584, 96
    %v588 = vpop.permute.xlu0 %587
    %v590 = vmul.f32 %v585, %v588
    %v591 = vmul.f32 %v573, %v370
    %v592 = vadd.f32 %v590, %v591
    %594 = vrot.lane.b32.xlu0 %v592, 96
    %v595 = vpop.permute.xlu0 %594
    %v597 = vsel %vm297, %v595, %v488
    %v598 = vpack.c.bf16 %v597, %v597
    %v600 = vsel %vm420, %v598, 0
    %602 = vmatprep.subr.bf16.mxu0 0
    %603 = vmatpush1.bf16.msra.mxu0 %v412
    %604 = vmatprep.subr.bf16.mxu0 0
    %605 = vmatpush1.bf16.msra.mxu0 %v413
    %606 = vmatprep.subr.bf16.mxu0 0
    %607 = vmatpush1.bf16.msra.mxu0 %v414
    %608 = vmatprep.subr.bf16.mxu0 0
    %609 = vmatpush1.bf16.msra.mxu0 %v415
    %610 = vmatprep.subr.bf16.mxu0 0
    %611 = vmatpush1.bf16.msra.mxu0 0
    %612 = vmatprep.subr.bf16.mxu0 0
    %613 = vmatpush1.bf16.msra.mxu0 0
    %614 = vmatprep.subr.bf16.mxu0 0
    %615 = vmatpush1.bf16.msra.mxu0 0
    %616 = vmatprep.subr.bf16.mxu0 0
    %617 = vmatpush1.bf16.msra.mxu0 0
    %618 = vmatprep.subr.bf16.mxu0 0
    %619 = vmatpush1.bf16.msra.mxu0 0
    %620 = vmatprep.subr.bf16.mxu0 0
    %621 = vmatpush1.bf16.msra.mxu0 0
    %622 = vmatprep.subr.bf16.mxu0 0
    %623 = vmatpush1.bf16.msra.mxu0 0
    %624 = vmatprep.subr.bf16.mxu0 0
    %625 = vmatpush1.bf16.msra.mxu0 0
    %626 = vmatprep.subr.bf16.mxu0 0
    %627 = vmatpush1.bf16.msra.mxu0 0
    %628 = vmatprep.subr.bf16.mxu0 0
    %629 = vmatpush1.bf16.msra.mxu0 0
    %630 = vmatprep.subr.bf16.mxu0 0
    %631 = vmatpush1.bf16.msra.mxu0 0
    %632 = vmatprep.subr.bf16.mxu0 0
    %633 = vmatpush1.bf16.msra.mxu0 0
    %634 = vmatprep.mubr.bf16.mxu0 0
    %635 = vmatmul.mubr.bf16.gmra.mrb[0].mxu0 %v600
    %v636 = vpop.f32.mrb[0].mxu0
    %v637 = vadd.f32 %v394, %v636
    %v638 = vpop.f32.mrb[0].mxu0
    %v639 = vpop.f32.mrb[0].mxu0
    %v640 = vpop.f32.mrb[0].mxu0
    %641 = vdwg.mxu0
    %v642 = vxor.u32 %v637, 2147483648
    %v643 = vmul.f32 %v642, 1.442695
    %v644 = vpow.pop %v643
    %v645 = vadd.f32 %v644, 1.0
    %v646 = vrcp.pop %v645
    %v647 = vmul.f32 1.0, %v646
    %649 = vrot.lane.b32.xlu0 %v637, 32
    %v650 = vpop.permute.xlu0 %649
    %v652 = vmul.f32 %v647, %v650
    %654 = vrot.lane.b32.xlu0 %v652, 64
    %v655 = vpop.permute.xlu0 %654
    %v657 = vadd.f32 %v637, %v655
    %v658 = vtanh.pop %v657
    %v659 = vsub.f32 1.0, %v647
    %661 = vrot.lane.b32.xlu0 %v658, 96
    %v662 = vpop.permute.xlu0 %661
    %v664 = vmul.f32 %v659, %v662
    %v665 = vmul.f32 %v647, %v488
    %v666 = vadd.f32 %v664, %v665
    %v667 = vmul.f32 %v666, %v495
    %669 = vrot.lane.b32.xlu0 %v667, 96
    %v670 = vpop.permute.xlu0 %669
    %v672 = vsel %vm502, %v670, 0.0
    %673 = vadd.xlane.f32.xlu0 %v672
    %v674 = vpop.xlane.xlu0 %673
    %v675 = vadd.f32 %v674, %v510
    %677 = vset.pattern.permute.xlu0 0
    %678 = vperm.xlu0 %677, %v675
    %v679 = vpop.permute.xlu0 %678
    %v681 = vmul.f32 %v679, %v274
    %v682 = vadd.f32 %v681, %v281
    %v683 = vpack.c.bf16 %v592, %v592
    %685 = vrot.lane.b32.xlu0 %v683, 96
    %v686 = vpop.permute.xlu0 %685
    %v688 = vsel %vm297, %v686, 0
    %690 = vmatprep.subr.bf16.mxu0 0
    %691 = vmatpush1.bf16.msra.mxu0 %v293
    %692 = vmatprep.subr.bf16.mxu0 0
    %693 = vmatpush1.bf16.msra.mxu0 %v294
    %694 = vmatprep.subr.bf16.mxu0 0
    %695 = vmatpush1.bf16.msra.mxu0 0
    %696 = vmatprep.subr.bf16.mxu0 0
    %697 = vmatpush1.bf16.msra.mxu0 0
    %698 = vmatprep.subr.bf16.mxu0 0
    %699 = vmatpush1.bf16.msra.mxu0 0
    %700 = vmatprep.subr.bf16.mxu0 0
    %701 = vmatpush1.bf16.msra.mxu0 0
    %702 = vmatprep.subr.bf16.mxu0 0
    %703 = vmatpush1.bf16.msra.mxu0 0
    %704 = vmatprep.subr.bf16.mxu0 0
    %705 = vmatpush1.bf16.msra.mxu0 0
    %706 = vmatprep.subr.bf16.mxu0 0
    %707 = vmatpush1.bf16.msra.mxu0 0
    %708 = vmatprep.subr.bf16.mxu0 0
    %709 = vmatpush1.bf16.msra.mxu0 0
    %710 = vmatprep.subr.bf16.mxu0 0
    %711 = vmatpush1.bf16.msra.mxu0 0
    %712 = vmatprep.subr.bf16.mxu0 0
    %713 = vmatpush1.bf16.msra.mxu0 0
    %714 = vmatprep.subr.bf16.mxu0 0
    %715 = vmatpush1.bf16.msra.mxu0 0
    %716 = vmatprep.subr.bf16.mxu0 0
    %717 = vmatpush1.bf16.msra.mxu0 0
    %718 = vmatprep.subr.bf16.mxu0 0
    %719 = vmatpush1.bf16.msra.mxu0 0
    %720 = vmatprep.subr.bf16.mxu0 0
    %721 = vmatpush1.bf16.msra.mxu0 0
    %722 = vmatprep.mubr.bf16.mxu0 0
    %723 = vmatmul.mubr.bf16.gmra.mrb[0].mxu0 %v688
    %v724 = vpop.f32.mrb[0].mxu0
    %v725 = vadd.f32 0.0, %v724
    %v726 = vpop.f32.mrb[0].mxu0
    %v727 = vpop.f32.mrb[0].mxu0
    %v728 = vpop.f32.mrb[0].mxu0
    %729 = vdwg.mxu0
    %v730 = vadd.f32 %v682, %v725
    %v731 = vxor.u32 %v730, 2147483648
    %v732 = vmul.f32 %v731, 1.442695
    %v733 = vpow.pop %v732
    %v734 = vadd.f32 %v733, 1.0
    %v735 = vrcp.pop %v734
    %v736 = vmul.f32 1.0, %v735
    %738 = vrot.lane.b32.xlu0 %v730, 32
    %v739 = vpop.permute.xlu0 %738
    %v741 = vmul.f32 %v736, %v739
    %743 = vrot.lane.b32.xlu0 %v741, 64
    %v744 = vpop.permute.xlu0 %743
    %v746 = vadd.f32 %v730, %v744
    %v747 = vtanh.pop %v746
    %v748 = vsub.f32 1.0, %v736
    %750 = vrot.lane.b32.xlu0 %v747, 96
    %v751 = vpop.permute.xlu0 %750
    %v753 = vmul.f32 %v748, %v751
    %v754 = vmul.f32 %v736, %v592
    %v755 = vadd.f32 %v753, %v754
    %757 = vrot.lane.b32.xlu0 %v755, 96
    %v758 = vpop.permute.xlu0 %757
    %v760 = vsel %vm297, %v758, %v666
    %v761 = vpack.c.bf16 %v760, %v760
    %v763 = vsel %vm420, %v761, 0
    %765 = vmatprep.subr.bf16.mxu0 0
    %766 = vmatpush1.bf16.msra.mxu0 %v412
    %767 = vmatprep.subr.bf16.mxu0 0
    %768 = vmatpush1.bf16.msra.mxu0 %v413
    %769 = vmatprep.subr.bf16.mxu0 0
    %770 = vmatpush1.bf16.msra.mxu0 %v414
    %771 = vmatprep.subr.bf16.mxu0 0
    %772 = vmatpush1.bf16.msra.mxu0 %v415
    %773 = vmatprep.subr.bf16.mxu0 0
    %774 = vmatpush1.bf16.msra.mxu0 0
    %775 = vmatprep.subr.bf16.mxu0 0
    %776 = vmatpush1.bf16.msra.mxu0 0
    %777 = vmatprep.subr.bf16.mxu0 0
    %778 = vmatpush1.bf16.msra.mxu0 0
    %779 = vmatprep.subr.bf16.mxu0 0
    %780 = vmatpush1.bf16.msra.mxu0 0
    %781 = vmatprep.subr.bf16.mxu0 0
    %782 = vmatpush1.bf16.msra.mxu0 0
    %783 = vmatprep.subr.bf16.mxu0 0
    %784 = vmatpush1.bf16.msra.mxu0 0
    %785 = vmatprep.subr.bf16.mxu0 0
    %786 = vmatpush1.bf16.msra.mxu0 0
    %787 = vmatprep.subr.bf16.mxu0 0
    %788 = vmatpush1.bf16.msra.mxu0 0
    %789 = vmatprep.subr.bf16.mxu0 0
    %790 = vmatpush1.bf16.msra.mxu0 0
    %791 = vmatprep.subr.bf16.mxu0 0
    %792 = vmatpush1.bf16.msra.mxu0 0
    %793 = vmatprep.subr.bf16.mxu0 0
    %794 = vmatpush1.bf16.msra.mxu0 0
    %795 = vmatprep.subr.bf16.mxu0 0
    %796 = vmatpush1.bf16.msra.mxu0 0
    %797 = vmatprep.mubr.bf16.mxu0 0
    %798 = vmatmul.mubr.bf16.gmra.mrb[0].mxu0 %v763
    %v799 = vpop.f32.mrb[0].mxu0
    %v800 = vadd.f32 %v394, %v799
    %v801 = vpop.f32.mrb[0].mxu0
    %v802 = vpop.f32.mrb[0].mxu0
    %v803 = vpop.f32.mrb[0].mxu0
    %804 = vdwg.mxu0
    %v805 = vxor.u32 %v800, 2147483648
    %v806 = vmul.f32 %v805, 1.442695
    %v807 = vpow.pop %v806
    %v808 = vadd.f32 %v807, 1.0
    %v809 = vrcp.pop %v808
    %v810 = vmul.f32 1.0, %v809
    %812 = vrot.lane.b32.xlu0 %v800, 32
    %v813 = vpop.permute.xlu0 %812
    %v815 = vmul.f32 %v810, %v813
    %817 = vrot.lane.b32.xlu0 %v815, 64
    %v818 = vpop.permute.xlu0 %817
    %v820 = vadd.f32 %v800, %v818
    %v821 = vtanh.pop %v820
    %v822 = vsub.f32 1.0, %v810
    %824 = vrot.lane.b32.xlu0 %v821, 96
    %v825 = vpop.permute.xlu0 %824
    %v827 = vmul.f32 %v822, %v825
    %v828 = vmul.f32 %v810, %v666
    %v829 = vadd.f32 %v827, %v828
    %v830 = vmul.f32 %v829, %v495
    %832 = vrot.lane.b32.xlu0 %v830, 96
    %v833 = vpop.permute.xlu0 %832
    %v835 = vsel %vm502, %v833, 0.0
    %836 = vadd.xlane.f32.xlu0 %v835
    %v837 = vpop.xlane.xlu0 %836
    %v838 = vadd.f32 %v837, %v510
    %840 = vset.pattern.permute.xlu0 0
    %841 = vperm.xlu0 %840, %v838
    %v842 = vpop.permute.xlu0 %841
    %v844 = vmul.f32 %v842, %v274
    %v845 = vadd.f32 %v844, %v281
    %v846 = vpack.c.bf16 %v755, %v755
    %848 = vrot.lane.b32.xlu0 %v846, 96
    %v849 = vpop.permute.xlu0 %848
    %v851 = vsel %vm297, %v849, 0
    %853 = vmatprep.subr.bf16.mxu0 0
    %854 = vmatpush1.bf16.msra.mxu0 %v293
    %855 = vmatprep.subr.bf16.mxu0 0
    %856 = vmatpush1.bf16.msra.mxu0 %v294
    %857 = vmatprep.subr.bf16.mxu0 0
    %858 = vmatpush1.bf16.msra.mxu0 0
    %859 = vmatprep.subr.bf16.mxu0 0
    %860 = vmatpush1.bf16.msra.mxu0 0
    %861 = vmatprep.subr.bf16.mxu0 0
    %862 = vmatpush1.bf16.msra.mxu0 0
    %863 = vmatprep.subr.bf16.mxu0 0
    %864 = vmatpush1.bf16.msra.mxu0 0
    %865 = vmatprep.subr.bf16.mxu0 0
    %866 = vmatpush1.bf16.msra.mxu0 0
    %867 = vmatprep.subr.bf16.mxu0 0
    %868 = vmatpush1.bf16.msra.mxu0 0
    %869 = vmatprep.subr.bf16.mxu0 0
    %870 = vmatpush1.bf16.msra.mxu0 0
    %871 = vmatprep.subr.bf16.mxu0 0
    %872 = vmatpush1.bf16.msra.mxu0 0
    %873 = vmatprep.subr.bf16.mxu0 0
    %874 = vmatpush1.bf16.msra.mxu0 0
    %875 = vmatprep.subr.bf16.mxu0 0
    %876 = vmatpush1.bf16.msra.mxu0 0
    %877 = vmatprep.subr.bf16.mxu0 0
    %878 = vmatpush1.bf16.msra.mxu0 0
    %879 = vmatprep.subr.bf16.mxu0 0
    %880 = vmatpush1.bf16.msra.mxu0 0
    %881 = vmatprep.subr.bf16.mxu0 0
    %882 = vmatpush1.bf16.msra.mxu0 0
    %883 = vmatprep.subr.bf16.mxu0 0
    %884 = vmatpush1.bf16.msra.mxu0 0
    %885 = vmatprep.mubr.bf16.mxu0 0
    %886 = vmatmul.mubr.bf16.gmra.mrb[0].mxu0 %v851
    %v887 = vpop.f32.mrb[0].mxu0
    %v888 = vadd.f32 0.0, %v887
    %v889 = vpop.f32.mrb[0].mxu0
    %v890 = vpop.f32.mrb[0].mxu0
    %v891 = vpop.f32.mrb[0].mxu0
    %892 = vdwg.mxu0
    %v893 = vadd.f32 %v845, %v888
    %v894 = vxor.u32 %v893, 2147483648
    %v895 = vmul.f32 %v894, 1.442695
    %v896 = vpow.pop %v895
    %v897 = vadd.f32 %v896, 1.0
    %v898 = vrcp.pop %v897
    %v899 = vmul.f32 1.0, %v898
    %901 = vrot.lane.b32.xlu0 %v893, 32
    %v902 = vpop.permute.xlu0 %901
    %v904 = vmul.f32 %v899, %v902
    %906 = vrot.lane.b32.xlu0 %v904, 64
    %v907 = vpop.permute.xlu0 %906
    %v909 = vadd.f32 %v893, %v907
    %v910 = vtanh.pop %v909
    %v911 = vsub.f32 1.0, %v899
    %913 = vrot.lane.b32.xlu0 %v910, 96
    %v914 = vpop.permute.xlu0 %913
    %v916 = vmul.f32 %v911, %v914
    %v917 = vmul.f32 %v899, %v755
    %v918 = vadd.f32 %v916, %v917
    %920 = vrot.lane.b32.xlu0 %v918, 96
    %v921 = vpop.permute.xlu0 %920
    %v923 = vsel %vm297, %v921, %v829
    %v924 = vpack.c.bf16 %v923, %v923
    %v926 = vsel %vm420, %v924, 0
    %928 = vmatprep.subr.bf16.mxu0 0
    %929 = vmatpush1.bf16.msra.mxu0 %v412
    %930 = vmatprep.subr.bf16.mxu0 0
    %931 = vmatpush1.bf16.msra.mxu0 %v413
    %932 = vmatprep.subr.bf16.mxu0 0
    %933 = vmatpush1.bf16.msra.mxu0 %v414
    %934 = vmatprep.subr.bf16.mxu0 0
    %935 = vmatpush1.bf16.msra.mxu0 %v415
    %936 = vmatprep.subr.bf16.mxu0 0
    %937 = vmatpush1.bf16.msra.mxu0 0
    %938 = vmatprep.subr.bf16.mxu0 0
    %939 = vmatpush1.bf16.msra.mxu0 0
    %940 = vmatprep.subr.bf16.mxu0 0
    %941 = vmatpush1.bf16.msra.mxu0 0
    %942 = vmatprep.subr.bf16.mxu0 0
    %943 = vmatpush1.bf16.msra.mxu0 0
    %944 = vmatprep.subr.bf16.mxu0 0
    %945 = vmatpush1.bf16.msra.mxu0 0
    %946 = vmatprep.subr.bf16.mxu0 0
    %947 = vmatpush1.bf16.msra.mxu0 0
    %948 = vmatprep.subr.bf16.mxu0 0
    %949 = vmatpush1.bf16.msra.mxu0 0
    %950 = vmatprep.subr.bf16.mxu0 0
    %951 = vmatpush1.bf16.msra.mxu0 0
    %952 = vmatprep.subr.bf16.mxu0 0
    %953 = vmatpush1.bf16.msra.mxu0 0
    %954 = vmatprep.subr.bf16.mxu0 0
    %955 = vmatpush1.bf16.msra.mxu0 0
    %956 = vmatprep.subr.bf16.mxu0 0
    %957 = vmatpush1.bf16.msra.mxu0 0
    %958 = vmatprep.subr.bf16.mxu0 0
    %959 = vmatpush1.bf16.msra.mxu0 0
    %960 = vmatprep.mubr.bf16.mxu0 0
    %961 = vmatmul.mubr.bf16.gmra.mrb[0].mxu0 %v926
    %v962 = vpop.f32.mrb[0].mxu0
    %v963 = vadd.f32 %v394, %v962
    %v964 = vpop.f32.mrb[0].mxu0
    %v965 = vpop.f32.mrb[0].mxu0
    %v966 = vpop.f32.mrb[0].mxu0
    %967 = vdwg.mxu0
    %v968 = vxor.u32 %v963, 2147483648
    %v969 = vmul.f32 %v968, 1.442695
    %v970 = vpow.pop %v969
    %v971 = vadd.f32 %v970, 1.0
    %v972 = vrcp.pop %v971
    %v973 = vmul.f32 1.0, %v972
    %975 = vrot.lane.b32.xlu0 %v963, 32
    %v976 = vpop.permute.xlu0 %975
    %v978 = vmul.f32 %v973, %v976
    %980 = vrot.lane.b32.xlu0 %v978, 64
    %v981 = vpop.permute.xlu0 %980
    %v983 = vadd.f32 %v963, %v981
    %v984 = vtanh.pop %v983
    %v985 = vsub.f32 1.0, %v973
    %987 = vrot.lane.b32.xlu0 %v984, 96
    %v988 = vpop.permute.xlu0 %987
    %v990 = vmul.f32 %v985, %v988
    %v991 = vmul.f32 %v973, %v829
    %v992 = vadd.f32 %v990, %v991
    %v993 = vmul.f32 %v992, %v495
    %995 = vrot.lane.b32.xlu0 %v993, 96
    %v996 = vpop.permute.xlu0 %995
    %v998 = vsel %vm502, %v996, 0.0
    %999 = vadd.xlane.f32.xlu0 %v998
    %v1000 = vpop.xlane.xlu0 %999
    %v1001 = vadd.f32 %v1000, %v510
    %1003 = vset.pattern.permute.xlu0 0
    %1004 = vperm.xlu0 %1003, %v1001
    %v1005 = vpop.permute.xlu0 %1004
    %v1007 = vmul.f32 %v1005, %v274
    %v1008 = vadd.f32 %v1007, %v281
    %v1009 = vpack.c.bf16 %v918, %v918
    %1011 = vrot.lane.b32.xlu0 %v1009, 96
    %v1012 = vpop.permute.xlu0 %1011
    %v1014 = vsel %vm297, %v1012, 0
    %1016 = vmatprep.subr.bf16.mxu0 0
    %1017 = vmatpush1.bf16.msra.mxu0 %v293
    %1018 = vmatprep.subr.bf16.mxu0 0
    %1019 = vmatpush1.bf16.msra.mxu0 %v294
    %1020 = vmatprep.subr.bf16.mxu0 0
    %1021 = vmatpush1.bf16.msra.mxu0 0
    %1022 = vmatprep.subr.bf16.mxu0 0
    %1023 = vmatpush1.bf16.msra.mxu0 0
    %1024 = vmatprep.subr.bf16.mxu0 0
    %1025 = vmatpush1.bf16.msra.mxu0 0
    %1026 = vmatprep.subr.bf16.mxu0 0
    %1027 = vmatpush1.bf16.msra.mxu0 0
    %1028 = vmatprep.subr.bf16.mxu0 0
    %1029 = vmatpush1.bf16.msra.mxu0 0
    %1030 = vmatprep.subr.bf16.mxu0 0
    %1031 = vmatpush1.bf16.msra.mxu0 0
    %1032 = vmatprep.subr.bf16.mxu0 0
    %1033 = vmatpush1.bf16.msra.mxu0 0
    %1034 = vmatprep.subr.bf16.mxu0 0
    %1035 = vmatpush1.bf16.msra.mxu0 0
    %1036 = vmatprep.subr.bf16.mxu0 0
    %1037 = vmatpush1.bf16.msra.mxu0 0
    %1038 = vmatprep.subr.bf16.mxu0 0
    %1039 = vmatpush1.bf16.msra.mxu0 0
    %1040 = vmatprep.subr.bf16.mxu0 0
    %1041 = vmatpush1.bf16.msra.mxu0 0
    %1042 = vmatprep.subr.bf16.mxu0 0
    %1043 = vmatpush1.bf16.msra.mxu0 0
    %1044 = vmatprep.subr.bf16.mxu0 0
    %1045 = vmatpush1.bf16.msra.mxu0 0
    %1046 = vmatprep.subr.bf16.mxu0 0
    %1047 = vmatpush1.bf16.msra.mxu0 0
    %1048 = vmatprep.mubr.bf16.mxu0 0
    %1049 = vmatmul.mubr.bf16.gmra.mrb[0].mxu0 %v1014
    %v1050 = vpop.f32.mrb[0].mxu0
    %v1051 = vadd.f32 0.0, %v1050
    %v1052 = vpop.f32.mrb[0].mxu0
    %v1053 = vpop.f32.mrb[0].mxu0
    %v1054 = vpop.f32.mrb[0].mxu0
    %1055 = vdwg.mxu0
    %v1056 = vadd.f32 %v1008, %v1051
    %v1057 = vxor.u32 %v1056, 2147483648
    %v1058 = vmul.f32 %v1057, 1.442695
    %v1059 = vpow.pop %v1058
    %v1060 = vadd.f32 %v1059, 1.0
    %v1061 = vrcp.pop %v1060
    %v1062 = vmul.f32 1.0, %v1061
    %1064 = vrot.lane.b32.xlu0 %v1056, 32
    %v1065 = vpop.permute.xlu0 %1064
    %v1067 = vmul.f32 %v1062, %v1065
    %1069 = vrot.lane.b32.xlu0 %v1067, 64
    %v1070 = vpop.permute.xlu0 %1069
    %v1072 = vadd.f32 %v1056, %v1070
    %v1073 = vtanh.pop %v1072
    %v1074 = vsub.f32 1.0, %v1062
    %1076 = vrot.lane.b32.xlu0 %v1073, 96
    %v1077 = vpop.permute.xlu0 %1076
    %v1079 = vmul.f32 %v1074, %v1077
    %v1080 = vmul.f32 %v1062, %v918
    %v1081 = vadd.f32 %v1079, %v1080
    %1083 = vrot.lane.b32.xlu0 %v1081, 96
    %v1084 = vpop.permute.xlu0 %1083
    %v1086 = vsel %vm297, %v1084, %v992
    %v1087 = vpack.c.bf16 %v1086, %v1086
    %v1089 = vsel %vm420, %v1087, 0
    %1091 = vmatprep.subr.bf16.mxu0 0
    %1092 = vmatpush1.bf16.msra.mxu0 %v412
    %1093 = vmatprep.subr.bf16.mxu0 0
    %1094 = vmatpush1.bf16.msra.mxu0 %v413
    %1095 = vmatprep.subr.bf16.mxu0 0
    %1096 = vmatpush1.bf16.msra.mxu0 %v414
    %1097 = vmatprep.subr.bf16.mxu0 0
    %1098 = vmatpush1.bf16.msra.mxu0 %v415
    %1099 = vmatprep.subr.bf16.mxu0 0
    %1100 = vmatpush1.bf16.msra.mxu0 0
    %1101 = vmatprep.subr.bf16.mxu0 0
    %1102 = vmatpush1.bf16.msra.mxu0 0
    %1103 = vmatprep.subr.bf16.mxu0 0
    %1104 = vmatpush1.bf16.msra.mxu0 0
    %1105 = vmatprep.subr.bf16.mxu0 0
    %1106 = vmatpush1.bf16.msra.mxu0 0
    %1107 = vmatprep.subr.bf16.mxu0 0
    %1108 = vmatpush1.bf16.msra.mxu0 0
    %1109 = vmatprep.subr.bf16.mxu0 0
    %1110 = vmatpush1.bf16.msra.mxu0 0
    %1111 = vmatprep.subr.bf16.mxu0 0
    %1112 = vmatpush1.bf16.msra.mxu0 0
    %1113 = vmatprep.subr.bf16.mxu0 0
    %1114 = vmatpush1.bf16.msra.mxu0 0
    %1115 = vmatprep.subr.bf16.mxu0 0
    %1116 = vmatpush1.bf16.msra.mxu0 0
    %1117 = vmatprep.subr.bf16.mxu0 0
    %1118 = vmatpush1.bf16.msra.mxu0 0
    %1119 = vmatprep.subr.bf16.mxu0 0
    %1120 = vmatpush1.bf16.msra.mxu0 0
    %1121 = vmatprep.subr.bf16.mxu0 0
    %1122 = vmatpush1.bf16.msra.mxu0 0
    %1123 = vmatprep.mubr.bf16.mxu0 0
    %1124 = vmatmul.mubr.bf16.gmra.mrb[0].mxu0 %v1089
    %v1125 = vpop.f32.mrb[0].mxu0
    %v1126 = vadd.f32 %v394, %v1125
    %v1127 = vpop.f32.mrb[0].mxu0
    %v1128 = vpop.f32.mrb[0].mxu0
    %v1129 = vpop.f32.mrb[0].mxu0
    %1130 = vdwg.mxu0
    %v1131 = vxor.u32 %v1126, 2147483648
    %v1132 = vmul.f32 %v1131, 1.442695
    %v1133 = vpow.pop %v1132
    %v1134 = vadd.f32 %v1133, 1.0
    %v1135 = vrcp.pop %v1134
    %v1136 = vmul.f32 1.0, %v1135
    %1138 = vrot.lane.b32.xlu0 %v1126, 32
    %v1139 = vpop.permute.xlu0 %1138
    %v1141 = vmul.f32 %v1136, %v1139
    %1143 = vrot.lane.b32.xlu0 %v1141, 64
    %v1144 = vpop.permute.xlu0 %1143
    %v1146 = vadd.f32 %v1126, %v1144
    %v1147 = vtanh.pop %v1146
    %v1148 = vsub.f32 1.0, %v1136
    %1150 = vrot.lane.b32.xlu0 %v1147, 96
    %v1151 = vpop.permute.xlu0 %1150
    %v1153 = vmul.f32 %v1148, %v1151
    %v1154 = vmul.f32 %v1136, %v992
    %v1155 = vadd.f32 %v1153, %v1154
    %v1156 = vmul.f32 %v1155, %v495
    %1158 = vrot.lane.b32.xlu0 %v1156, 96
    %v1159 = vpop.permute.xlu0 %1158
    %v1161 = vsel %vm502, %v1159, 0.0
    %1162 = vadd.xlane.f32.xlu0 %v1161
    %v1163 = vpop.xlane.xlu0 %1162
    %v1164 = vadd.f32 %v1163, %v510
    %1166 = vset.pattern.permute.xlu0 0
    %1167 = vperm.xlu0 %1166, %v1164
    %v1168 = vpop.permute.xlu0 %1167
    %v1170 = vmul.f32 %v1168, %v274
    %v1171 = vadd.f32 %v1170, %v281
    %v1172 = vpack.c.bf16 %v1081, %v1081
    %1174 = vrot.lane.b32.xlu0 %v1172, 96
    %v1175 = vpop.permute.xlu0 %1174
    %v1177 = vsel %vm297, %v1175, 0
    %1179 = vmatprep.subr.bf16.mxu0 0
    %1180 = vmatpush1.bf16.msra.mxu0 %v293
    %1181 = vmatprep.subr.bf16.mxu0 0
    %1182 = vmatpush1.bf16.msra.mxu0 %v294
    %1183 = vmatprep.subr.bf16.mxu0 0
    %1184 = vmatpush1.bf16.msra.mxu0 0
    %1185 = vmatprep.subr.bf16.mxu0 0
    %1186 = vmatpush1.bf16.msra.mxu0 0
    %1187 = vmatprep.subr.bf16.mxu0 0
    %1188 = vmatpush1.bf16.msra.mxu0 0
    %1189 = vmatprep.subr.bf16.mxu0 0
    %1190 = vmatpush1.bf16.msra.mxu0 0
    %1191 = vmatprep.subr.bf16.mxu0 0
    %1192 = vmatpush1.bf16.msra.mxu0 0
    %1193 = vmatprep.subr.bf16.mxu0 0
    %1194 = vmatpush1.bf16.msra.mxu0 0
    %1195 = vmatprep.subr.bf16.mxu0 0
    %1196 = vmatpush1.bf16.msra.mxu0 0
    %1197 = vmatprep.subr.bf16.mxu0 0
    %1198 = vmatpush1.bf16.msra.mxu0 0
    %1199 = vmatprep.subr.bf16.mxu0 0
    %1200 = vmatpush1.bf16.msra.mxu0 0
    %1201 = vmatprep.subr.bf16.mxu0 0
    %1202 = vmatpush1.bf16.msra.mxu0 0
    %1203 = vmatprep.subr.bf16.mxu0 0
    %1204 = vmatpush1.bf16.msra.mxu0 0
    %1205 = vmatprep.subr.bf16.mxu0 0
    %1206 = vmatpush1.bf16.msra.mxu0 0
    %1207 = vmatprep.subr.bf16.mxu0 0
    %1208 = vmatpush1.bf16.msra.mxu0 0
    %1209 = vmatprep.subr.bf16.mxu0 0
    %1210 = vmatpush1.bf16.msra.mxu0 0
    %1211 = vmatprep.mubr.bf16.mxu0 0
    %1212 = vmatmul.mubr.bf16.gmra.mrb[0].mxu0 %v1177
    %v1213 = vpop.f32.mrb[0].mxu0
    %v1214 = vadd.f32 0.0, %v1213
    %v1215 = vpop.f32.mrb[0].mxu0
    %v1216 = vpop.f32.mrb[0].mxu0
    %v1217 = vpop.f32.mrb[0].mxu0
    %1218 = vdwg.mxu0
    %v1219 = vadd.f32 %v1171, %v1214
    %v1220 = vxor.u32 %v1219, 2147483648
    %v1221 = vmul.f32 %v1220, 1.442695
    %v1222 = vpow.pop %v1221
    %v1223 = vadd.f32 %v1222, 1.0
    %v1224 = vrcp.pop %v1223
    %v1225 = vmul.f32 1.0, %v1224
    %1227 = vrot.lane.b32.xlu0 %v1219, 32
    %v1228 = vpop.permute.xlu0 %1227
    %v1230 = vmul.f32 %v1225, %v1228
    %1232 = vrot.lane.b32.xlu0 %v1230, 64
    %v1233 = vpop.permute.xlu0 %1232
    %v1235 = vadd.f32 %v1219, %v1233
    %v1236 = vtanh.pop %v1235
    %v1237 = vsub.f32 1.0, %v1225
    %1239 = vrot.lane.b32.xlu0 %v1236, 96
    %v1240 = vpop.permute.xlu0 %1239
    %v1242 = vmul.f32 %v1237, %v1240
    %v1243 = vmul.f32 %v1225, %v1081
    %v1244 = vadd.f32 %v1242, %v1243
    %1246 = vrot.lane.b32.xlu0 %v1244, 96
    %v1247 = vpop.permute.xlu0 %1246
    %v1249 = vsel %vm297, %v1247, %v1155
    %v1250 = vpack.c.bf16 %v1249, %v1249
    %v1252 = vsel %vm420, %v1250, 0
    %1254 = vmatprep.subr.bf16.mxu0 0
    %1255 = vmatpush1.bf16.msra.mxu0 %v412
    %1256 = vmatprep.subr.bf16.mxu0 0
    %1257 = vmatpush1.bf16.msra.mxu0 %v413
    %1258 = vmatprep.subr.bf16.mxu0 0
    %1259 = vmatpush1.bf16.msra.mxu0 %v414
    %1260 = vmatprep.subr.bf16.mxu0 0
    %1261 = vmatpush1.bf16.msra.mxu0 %v415
    %1262 = vmatprep.subr.bf16.mxu0 0
    %1263 = vmatpush1.bf16.msra.mxu0 0
    %1264 = vmatprep.subr.bf16.mxu0 0
    %1265 = vmatpush1.bf16.msra.mxu0 0
    %1266 = vmatprep.subr.bf16.mxu0 0
    %1267 = vmatpush1.bf16.msra.mxu0 0
    %1268 = vmatprep.subr.bf16.mxu0 0
    %1269 = vmatpush1.bf16.msra.mxu0 0
    %1270 = vmatprep.subr.bf16.mxu0 0
    %1271 = vmatpush1.bf16.msra.mxu0 0
    %1272 = vmatprep.subr.bf16.mxu0 0
    %1273 = vmatpush1.bf16.msra.mxu0 0
    %1274 = vmatprep.subr.bf16.mxu0 0
    %1275 = vmatpush1.bf16.msra.mxu0 0
    %1276 = vmatprep.subr.bf16.mxu0 0
    %1277 = vmatpush1.bf16.msra.mxu0 0
    %1278 = vmatprep.subr.bf16.mxu0 0
    %1279 = vmatpush1.bf16.msra.mxu0 0
    %1280 = vmatprep.subr.bf16.mxu0 0
    %1281 = vmatpush1.bf16.msra.mxu0 0
    %1282 = vmatprep.subr.bf16.mxu0 0
    %1283 = vmatpush1.bf16.msra.mxu0 0
    %1284 = vmatprep.subr.bf16.mxu0 0
    %1285 = vmatpush1.bf16.msra.mxu0 0
    %1286 = vmatprep.mubr.bf16.mxu0 0
    %1287 = vmatmul.mubr.bf16.gmra.mrb[0].mxu0 %v1252
    %v1288 = vpop.f32.mrb[0].mxu0
    %v1289 = vadd.f32 %v394, %v1288
    %v1290 = vpop.f32.mrb[0].mxu0
    %v1291 = vpop.f32.mrb[0].mxu0
    %v1292 = vpop.f32.mrb[0].mxu0
    %1293 = vdwg.mxu0
    %v1294 = vxor.u32 %v1289, 2147483648
    %v1295 = vmul.f32 %v1294, 1.442695
    %v1296 = vpow.pop %v1295
    %v1297 = vadd.f32 %v1296, 1.0
    %v1298 = vrcp.pop %v1297
    %v1299 = vmul.f32 1.0, %v1298
    %1301 = vrot.lane.b32.xlu0 %v1289, 32
    %v1302 = vpop.permute.xlu0 %1301
    %v1304 = vmul.f32 %v1299, %v1302
    %1306 = vrot.lane.b32.xlu0 %v1304, 64
    %v1307 = vpop.permute.xlu0 %1306
    %v1309 = vadd.f32 %v1289, %v1307
    %v1310 = vtanh.pop %v1309
    %v1311 = vsub.f32 1.0, %v1299
    %1313 = vrot.lane.b32.xlu0 %v1310, 96
    %v1314 = vpop.permute.xlu0 %1313
    %v1316 = vmul.f32 %v1311, %v1314
    %v1317 = vmul.f32 %v1299, %v1155
    %v1318 = vadd.f32 %v1316, %v1317
    %v1319 = vmul.f32 %v1318, %v495
    %1321 = vrot.lane.b32.xlu0 %v1319, 96
    %v1322 = vpop.permute.xlu0 %1321
    %v1324 = vsel %vm502, %v1322, 0.0
    %1325 = vadd.xlane.f32.xlu0 %v1324
    %v1326 = vpop.xlane.xlu0 %1325
    %v1327 = vadd.f32 %v1326, %v510
    %1329 = vset.pattern.permute.xlu0 0
    %1330 = vperm.xlu0 %1329, %v1327
    %v1331 = vpop.permute.xlu0 %1330
    %v1333 = vmul.f32 %v1331, %v274
    %v1334 = vadd.f32 %v1333, %v281
    %v1335 = vpack.c.bf16 %v1244, %v1244
    %1337 = vrot.lane.b32.xlu0 %v1335, 96
    %v1338 = vpop.permute.xlu0 %1337
    %v1340 = vsel %vm297, %v1338, 0
    %1342 = vmatprep.subr.bf16.mxu0 0
    %1343 = vmatpush1.bf16.msra.mxu0 %v293
    %1344 = vmatprep.subr.bf16.mxu0 0
    %1345 = vmatpush1.bf16.msra.mxu0 %v294
    %1346 = vmatprep.subr.bf16.mxu0 0
    %1347 = vmatpush1.bf16.msra.mxu0 0
    %1348 = vmatprep.subr.bf16.mxu0 0
    %1349 = vmatpush1.bf16.msra.mxu0 0
    %1350 = vmatprep.subr.bf16.mxu0 0
    %1351 = vmatpush1.bf16.msra.mxu0 0
    %1352 = vmatprep.subr.bf16.mxu0 0
    %1353 = vmatpush1.bf16.msra.mxu0 0
    %1354 = vmatprep.subr.bf16.mxu0 0
    %1355 = vmatpush1.bf16.msra.mxu0 0
    %1356 = vmatprep.subr.bf16.mxu0 0
    %1357 = vmatpush1.bf16.msra.mxu0 0
    %1358 = vmatprep.subr.bf16.mxu0 0
    %1359 = vmatpush1.bf16.msra.mxu0 0
    %1360 = vmatprep.subr.bf16.mxu0 0
    %1361 = vmatpush1.bf16.msra.mxu0 0
    %1362 = vmatprep.subr.bf16.mxu0 0
    %1363 = vmatpush1.bf16.msra.mxu0 0
    %1364 = vmatprep.subr.bf16.mxu0 0
    %1365 = vmatpush1.bf16.msra.mxu0 0
    %1366 = vmatprep.subr.bf16.mxu0 0
    %1367 = vmatpush1.bf16.msra.mxu0 0
    %1368 = vmatprep.subr.bf16.mxu0 0
    %1369 = vmatpush1.bf16.msra.mxu0 0
    %1370 = vmatprep.subr.bf16.mxu0 0
    %1371 = vmatpush1.bf16.msra.mxu0 0
    %1372 = vmatprep.subr.bf16.mxu0 0
    %1373 = vmatpush1.bf16.msra.mxu0 0
    %1374 = vmatprep.mubr.bf16.mxu0 0
    %1375 = vmatmul.mubr.bf16.gmra.mrb[0].mxu0 %v1340
    %v1376 = vpop.f32.mrb[0].mxu0
    %v1377 = vadd.f32 0.0, %v1376
    %v1378 = vpop.f32.mrb[0].mxu0
    %v1379 = vpop.f32.mrb[0].mxu0
    %v1380 = vpop.f32.mrb[0].mxu0
    %1381 = vdwg.mxu0
    %v1382 = vadd.f32 %v1334, %v1377
    %v1383 = vxor.u32 %v1382, 2147483648
    %v1384 = vmul.f32 %v1383, 1.442695
    %v1385 = vpow.pop %v1384
    %v1386 = vadd.f32 %v1385, 1.0
    %v1387 = vrcp.pop %v1386
    %v1388 = vmul.f32 1.0, %v1387
    %1390 = vrot.lane.b32.xlu0 %v1382, 32
    %v1391 = vpop.permute.xlu0 %1390
    %v1393 = vmul.f32 %v1388, %v1391
    %1395 = vrot.lane.b32.xlu0 %v1393, 64
    %v1396 = vpop.permute.xlu0 %1395
    %v1398 = vadd.f32 %v1382, %v1396
    %v1399 = vtanh.pop %v1398
    %v1400 = vsub.f32 1.0, %v1388
    %1402 = vrot.lane.b32.xlu0 %v1399, 96
    %v1403 = vpop.permute.xlu0 %1402
    %v1405 = vmul.f32 %v1400, %v1403
    %v1406 = vmul.f32 %v1388, %v1244
    %v1407 = vadd.f32 %v1405, %v1406
    %1409 = vrot.lane.b32.xlu0 %v1407, 96
    %v1410 = vpop.permute.xlu0 %1409
    %v1412 = vsel %vm297, %v1410, %v1318
    %v1413 = vpack.c.bf16 %v1412, %v1412
    %v1415 = vsel %vm420, %v1413, 0
    %1417 = vmatprep.subr.bf16.mxu0 0
    %1418 = vmatpush1.bf16.msra.mxu0 %v412
    %1419 = vmatprep.subr.bf16.mxu0 0
    %1420 = vmatpush1.bf16.msra.mxu0 %v413
    %1421 = vmatprep.subr.bf16.mxu0 0
    %1422 = vmatpush1.bf16.msra.mxu0 %v414
    %1423 = vmatprep.subr.bf16.mxu0 0
    %1424 = vmatpush1.bf16.msra.mxu0 %v415
    %1425 = vmatprep.subr.bf16.mxu0 0
    %1426 = vmatpush1.bf16.msra.mxu0 0
    %1427 = vmatprep.subr.bf16.mxu0 0
    %1428 = vmatpush1.bf16.msra.mxu0 0
    %1429 = vmatprep.subr.bf16.mxu0 0
    %1430 = vmatpush1.bf16.msra.mxu0 0
    %1431 = vmatprep.subr.bf16.mxu0 0
    %1432 = vmatpush1.bf16.msra.mxu0 0
    %1433 = vmatprep.subr.bf16.mxu0 0
    %1434 = vmatpush1.bf16.msra.mxu0 0
    %1435 = vmatprep.subr.bf16.mxu0 0
    %1436 = vmatpush1.bf16.msra.mxu0 0
    %1437 = vmatprep.subr.bf16.mxu0 0
    %1438 = vmatpush1.bf16.msra.mxu0 0
    %1439 = vmatprep.subr.bf16.mxu0 0
    %1440 = vmatpush1.bf16.msra.mxu0 0
    %1441 = vmatprep.subr.bf16.mxu0 0
    %1442 = vmatpush1.bf16.msra.mxu0 0
    %1443 = vmatprep.subr.bf16.mxu0 0
    %1444 = vmatpush1.bf16.msra.mxu0 0
    %1445 = vmatprep.subr.bf16.mxu0 0
    %1446 = vmatpush1.bf16.msra.mxu0 0
    %1447 = vmatprep.subr.bf16.mxu0 0
    %1448 = vmatpush1.bf16.msra.mxu0 0
    %1449 = vmatprep.mubr.bf16.mxu0 0
    %1450 = vmatmul.mubr.bf16.gmra.mrb[0].mxu0 %v1415
    %v1451 = vpop.f32.mrb[0].mxu0
    %v1452 = vadd.f32 %v394, %v1451
    %v1453 = vpop.f32.mrb[0].mxu0
    %v1454 = vpop.f32.mrb[0].mxu0
    %v1455 = vpop.f32.mrb[0].mxu0
    %1456 = vdwg.mxu0
    %v1457 = vxor.u32 %v1452, 2147483648
    %v1458 = vmul.f32 %v1457, 1.442695
    %v1459 = vpow.pop %v1458
    %v1460 = vadd.f32 %v1459, 1.0
    %v1461 = vrcp.pop %v1460
    %v1462 = vmul.f32 1.0, %v1461
    %1464 = vrot.lane.b32.xlu0 %v1452, 32
    %v1465 = vpop.permute.xlu0 %1464
    %v1467 = vmul.f32 %v1462, %v1465
    %1469 = vrot.lane.b32.xlu0 %v1467, 64
    %v1470 = vpop.permute.xlu0 %1469
    %v1472 = vadd.f32 %v1452, %v1470
    %v1473 = vtanh.pop %v1472
    %v1474 = vsub.f32 1.0, %v1462
    %1476 = vrot.lane.b32.xlu0 %v1473, 96
    %v1477 = vpop.permute.xlu0 %1476
    %v1479 = vmul.f32 %v1474, %v1477
    %v1480 = vmul.f32 %v1462, %v1318
    %v1481 = vadd.f32 %v1479, %v1480
    %v1482 = vmul.f32 %v1481, %v495
    %1484 = vrot.lane.b32.xlu0 %v1482, 96
    %v1485 = vpop.permute.xlu0 %1484
    %v1487 = vsel %vm502, %v1485, 0.0
    %1488 = vadd.xlane.f32.xlu0 %v1487
    %v1489 = vpop.xlane.xlu0 %1488
    %v1490 = vadd.f32 %v1489, %v510
    %1492 = vset.pattern.permute.xlu0 0
    %1493 = vperm.xlu0 %1492, %v1490
    %v1494 = vpop.permute.xlu0 %1493
    %v1496 = vmul.f32 %v1494, %v274
    %v1497 = vadd.f32 %v1496, %v281
    %v1498 = vpack.c.bf16 %v1407, %v1407
    %1500 = vrot.lane.b32.xlu0 %v1498, 96
    %v1501 = vpop.permute.xlu0 %1500
    %v1503 = vsel %vm297, %v1501, 0
    %1505 = vmatprep.subr.bf16.mxu0 0
    %1506 = vmatpush1.bf16.msra.mxu0 %v293
    %1507 = vmatprep.subr.bf16.mxu0 0
    %1508 = vmatpush1.bf16.msra.mxu0 %v294
    %1509 = vmatprep.subr.bf16.mxu0 0
    %1510 = vmatpush1.bf16.msra.mxu0 0
    %1511 = vmatprep.subr.bf16.mxu0 0
    %1512 = vmatpush1.bf16.msra.mxu0 0
    %1513 = vmatprep.subr.bf16.mxu0 0
    %1514 = vmatpush1.bf16.msra.mxu0 0
    %1515 = vmatprep.subr.bf16.mxu0 0
    %1516 = vmatpush1.bf16.msra.mxu0 0
    %1517 = vmatprep.subr.bf16.mxu0 0
    %1518 = vmatpush1.bf16.msra.mxu0 0
    %1519 = vmatprep.subr.bf16.mxu0 0
    %1520 = vmatpush1.bf16.msra.mxu0 0
    %1521 = vmatprep.subr.bf16.mxu0 0
    %1522 = vmatpush1.bf16.msra.mxu0 0
    %1523 = vmatprep.subr.bf16.mxu0 0
    %1524 = vmatpush1.bf16.msra.mxu0 0
    %1525 = vmatprep.subr.bf16.mxu0 0
    %1526 = vmatpush1.bf16.msra.mxu0 0
    %1527 = vmatprep.subr.bf16.mxu0 0
    %1528 = vmatpush1.bf16.msra.mxu0 0
    %1529 = vmatprep.subr.bf16.mxu0 0
    %1530 = vmatpush1.bf16.msra.mxu0 0
    %1531 = vmatprep.subr.bf16.mxu0 0
    %1532 = vmatpush1.bf16.msra.mxu0 0
    %1533 = vmatprep.subr.bf16.mxu0 0
    %1534 = vmatpush1.bf16.msra.mxu0 0
    %1535 = vmatprep.subr.bf16.mxu0 0
    %1536 = vmatpush1.bf16.msra.mxu0 0
    %1537 = vmatprep.mubr.bf16.mxu0 0
    %1538 = vmatmul.mubr.bf16.gmra.mrb[0].mxu0 %v1503
    %v1539 = vpop.f32.mrb[0].mxu0
    %v1540 = vadd.f32 0.0, %v1539
    %v1541 = vpop.f32.mrb[0].mxu0
    %v1542 = vpop.f32.mrb[0].mxu0
    %v1543 = vpop.f32.mrb[0].mxu0
    %1544 = vdwg.mxu0
    %v1545 = vadd.f32 %v1497, %v1540
    %v1546 = vxor.u32 %v1545, 2147483648
    %v1547 = vmul.f32 %v1546, 1.442695
    %v1548 = vpow.pop %v1547
    %v1549 = vadd.f32 %v1548, 1.0
    %v1550 = vrcp.pop %v1549
    %v1551 = vmul.f32 1.0, %v1550
    %1553 = vrot.lane.b32.xlu0 %v1545, 32
    %v1554 = vpop.permute.xlu0 %1553
    %v1556 = vmul.f32 %v1551, %v1554
    %1558 = vrot.lane.b32.xlu0 %v1556, 64
    %v1559 = vpop.permute.xlu0 %1558
    %v1561 = vadd.f32 %v1545, %v1559
    %v1562 = vtanh.pop %v1561
    %v1563 = vsub.f32 1.0, %v1551
    %1565 = vrot.lane.b32.xlu0 %v1562, 96
    %v1566 = vpop.permute.xlu0 %1565
    %v1568 = vmul.f32 %v1563, %v1566
    %v1569 = vmul.f32 %v1551, %v1407
    %v1570 = vadd.f32 %v1568, %v1569
    %1572 = vrot.lane.b32.xlu0 %v1570, 96
    %v1573 = vpop.permute.xlu0 %1572
    %v1575 = vsel %vm297, %v1573, %v1481
    %v1576 = vpack.c.bf16 %v1575, %v1575
    %v1578 = vsel %vm420, %v1576, 0
    %1580 = vmatprep.subr.bf16.mxu0 0
    %1581 = vmatpush1.bf16.msra.mxu0 %v412
    %1582 = vmatprep.subr.bf16.mxu0 0
    %1583 = vmatpush1.bf16.msra.mxu0 %v413
    %1584 = vmatprep.subr.bf16.mxu0 0
    %1585 = vmatpush1.bf16.msra.mxu0 %v414
    %1586 = vmatprep.subr.bf16.mxu0 0
    %1587 = vmatpush1.bf16.msra.mxu0 %v415
    %1588 = vmatprep.subr.bf16.mxu0 0
    %1589 = vmatpush1.bf16.msra.mxu0 0
    %1590 = vmatprep.subr.bf16.mxu0 0
    %1591 = vmatpush1.bf16.msra.mxu0 0
    %1592 = vmatprep.subr.bf16.mxu0 0
    %1593 = vmatpush1.bf16.msra.mxu0 0
    %1594 = vmatprep.subr.bf16.mxu0 0
    %1595 = vmatpush1.bf16.msra.mxu0 0
    %1596 = vmatprep.subr.bf16.mxu0 0
    %1597 = vmatpush1.bf16.msra.mxu0 0
    %1598 = vmatprep.subr.bf16.mxu0 0
    %1599 = vmatpush1.bf16.msra.mxu0 0
    %1600 = vmatprep.subr.bf16.mxu0 0
    %1601 = vmatpush1.bf16.msra.mxu0 0
    %1602 = vmatprep.subr.bf16.mxu0 0
    %1603 = vmatpush1.bf16.msra.mxu0 0
    %1604 = vmatprep.subr.bf16.mxu0 0
    %1605 = vmatpush1.bf16.msra.mxu0 0
    %1606 = vmatprep.subr.bf16.mxu0 0
    %1607 = vmatpush1.bf16.msra.mxu0 0
    %1608 = vmatprep.subr.bf16.mxu0 0
    %1609 = vmatpush1.bf16.msra.mxu0 0
    %1610 = vmatprep.subr.bf16.mxu0 0
    %1611 = vmatpush1.bf16.msra.mxu0 0
    %1612 = vmatprep.mubr.bf16.mxu0 0
    %1613 = vmatmul.mubr.bf16.gmra.mrb[0].mxu0 %v1578
    %v1614 = vpop.f32.mrb[0].mxu0
    %v1615 = vadd.f32 %v394, %v1614
    %v1616 = vpop.f32.mrb[0].mxu0
    %v1617 = vpop.f32.mrb[0].mxu0
    %v1618 = vpop.f32.mrb[0].mxu0
    %1619 = vdwg.mxu0
    %v1620 = vxor.u32 %v1615, 2147483648
    %v1621 = vmul.f32 %v1620, 1.442695
    %v1622 = vpow.pop %v1621
    %v1623 = vadd.f32 %v1622, 1.0
    %v1624 = vrcp.pop %v1623
    %v1625 = vmul.f32 1.0, %v1624
    %1627 = vrot.lane.b32.xlu0 %v1615, 32
    %v1628 = vpop.permute.xlu0 %1627
    %v1630 = vmul.f32 %v1625, %v1628
    %1632 = vrot.lane.b32.xlu0 %v1630, 64
    %v1633 = vpop.permute.xlu0 %1632
    %v1635 = vadd.f32 %v1615, %v1633
    %v1636 = vtanh.pop %v1635
    %v1637 = vsub.f32 1.0, %v1625
    %1639 = vrot.lane.b32.xlu0 %v1636, 96
    %v1640 = vpop.permute.xlu0 %1639
    %v1642 = vmul.f32 %v1637, %v1640
    %v1643 = vmul.f32 %v1625, %v1481
    %v1644 = vadd.f32 %v1642, %v1643
    %v1645 = vmul.f32 %v1644, %v495
    %1647 = vrot.lane.b32.xlu0 %v1645, 96
    %v1648 = vpop.permute.xlu0 %1647
    %v1650 = vsel %vm502, %v1648, 0.0
    %1651 = vadd.xlane.f32.xlu0 %v1650
    %v1652 = vpop.xlane.xlu0 %1651
    %v1653 = vadd.f32 %v1652, %v510
    %1654 = vrot.lane.b32.xlu0 %v675, 1
    %v1655 = vpop.permute.xlu0 %1654
    %1657 = vrot.lane.b32.xlu0 %v838, 2
    %v1658 = vpop.permute.xlu0 %1657
    %1660 = vrot.lane.b32.xlu0 %v1001, 3
    %v1661 = vpop.permute.xlu0 %1660
    %1663 = vrot.lane.b32.xlu0 %v1164, 4
    %v1664 = vpop.permute.xlu0 %1663
    %1666 = vrot.lane.b32.xlu0 %v1327, 5
    %v1667 = vpop.permute.xlu0 %1666
    %1669 = vrot.lane.b32.xlu0 %v1490, 6
    %v1670 = vpop.permute.xlu0 %1669
    %1673 = vrot.lane.b32.xlu0 %v1653, 7
    %v1674 = vpop.permute.xlu0 %1673
    %vm1676 = vcmask 7168
    %v1677 = vsel %vm1676, %v512, %v1655
    %vm1678 = vcmask 15360
    %v1679 = vsel %vm1678, %v1677, %v1658
    %vm1680 = vcmask 23552
    %v1681 = vsel %vm1680, %v1679, %v1661
    %vm1682 = vcmask 31744
    %v1683 = vsel %vm1682, %v1681, %v1664
    %vm1684 = vcmask 39936
    %v1685 = vsel %vm1684, %v1683, %v1667
    %vm1686 = vcmask 48128
    %v1687 = vsel %vm1686, %v1685, %v1670
    %vm1688 = vcmask 56320
    %v1689 = vsel %vm1688, %v1687, %v1674
    %vm1690 = vcmask 58368
    %1691 = vst.msk [vmem:[#allocation3] sm:$0x3] %vm1690, %v1689
    // Predicated region
    $region46: #{tpu_custom_call.1} parent=1 // pred_check
      _
    $region47: #{tpu_custom_call.1} parent=1 // pred_check_branch
      %1693 = sbr.rel (0) target = $region49
    $region48: #{tpu_custom_call.1} parent=1 // pred_region
      %s1695 = ssub.s32 32, 32
      %1696 = vsyncadd [#allocation4], %s1695
      %s1698 = sshll.u32 [#allocation3], 4
      %s1699 = int_to_ptr.vmem [resolvable:$true] %s1698
      %1701 = dma.vmem_to_hbm [thread:$0]  %s1699, 32, %s11, [#allocation4]
    $region49: #{tpu_custom_call.1} parent=1 // pred_fallthru
      _
    // Predicated region
    $region50: #{tpu_custom_call.1} parent=1 // pred_check
      _
    $region51: #{tpu_custom_call.1} parent=1 // pred_check_branch
      %1703 = sbr.rel (0) target = $region53
    $region52: #{tpu_custom_call.1} parent=1 // pred_region
      %1704 = dma.done [#allocation4], 32
    $region53: #{tpu_custom_call.1} parent=1 // pred_fallthru
      _
    %1705 = vsyncpa [#allocation4], 1

</llo_original>
